<compile_context>
chip_gen: v5e
topology: v5e:2x2
jax: 0.10.0
libtpu: 0.0.40
codegen_flags: <defaults>
</compile_context>

<pallas_src>
import math

import jax
import jax.numpy as jnp
from jax import lax
from jax.experimental import pallas as pl
from jax.experimental.pallas import tpu as pltpu

BETA = 1.0          # module-level `beta` (softmax temperature) in adp_qtz_fan.py
BN_EPS = 1e-5
NUM_LEVEL_CONV = 4  # config.num_level_conv


def _round_up(n, m):
    return ((n + m - 1) // m) * m


# ------------------------------- Pallas kernel --------------------------------

def _make_preres_kernel(C, O, L, H, W, HP, WP, NQ, NTOT, n_flat, bn_count, base, off):
    """Fused quantize(w1,w2) + conv1 + BN(batch stats)+ReLU + conv2 + residual."""
    tap_offs = tuple(off + kj * WP + ki for kj in range(3) for ki in range(3))  # center = base
    inv_cnt = 1.0 / float(bn_count)
    tail = base + NQ

    def kernel(x_ref, pc_ref, ql_ref, g_ref, b_ref, o_ref, z_ref, pt_ref):
        # x_ref : (C, NTOT) f32   zero-padded channel-major flat input (col = flat idx + off)
        # pc_ref: (L, 2O, 9C) f32 quantization primitives: rows [:O] conv1, rows [O:] conv2
        # ql_ref: (L, 2O, 1) f32  per-level quantization values
        # g_ref / b_ref : (C, 1)  BN affine params
        # o_ref : (O, NQ) f32     output on the flat padded grid (valid lanes sliced outside)
        # z_ref : (C, NTOT) bf16  scratch: re-padded intermediate activation
        # pt_ref: (9C, NQ) bf16   scratch: in-VMEM im2col patches

        # ---- adaptive weight quantization for BOTH convs (was a second pallas_call) ----
        ps = [pc_ref[l] for l in range(L)]                      # each (2O, 9C) f32
        nrm = jnp.sqrt(sum(p * p for p in ps))                  # no eps: matches torch
        zs = [(BETA * p) / nrm for p in ps]
        zmax = zs[0]
        for t in zs[1:]:
            zmax = jnp.maximum(zmax, t)
        es = [jnp.exp(t - zmax) for t in zs]                    # shift-invariant softmax
        den = sum(es)
        w_all = sum(e * ql_ref[l] for l, e in enumerate(es)) / den   # (2O, 9C) f32
        w1 = w_all[:O, :].astype(jnp.bfloat16)
        w2 = w_all[O:, :].astype(jnp.bfloat16)

        # ---- validity mask of the flat padded grid, built in-kernel (static shapes) ----
        # f32 floor-division is exact here (small integer grid; 1e-5 bias absorbs rounding).
        qi = lax.broadcasted_iota(jnp.int32, (1, NQ), 1).astype(jnp.float32)
        img = jnp.floor(qi * (1.0 / float(HP * WP)) + 1e-5)
        rq = qi - img * float(HP * WP)                          # q mod (HP*WP), exact
        hh = jnp.floor(rq * (1.0 / float(WP)) + 1e-5)
        ww = rq - hh * float(WP)                                # q mod WP, exact
        mask = jnp.where((qi < float(n_flat)) & (hh < float(H)) & (ww < float(W)), 1.0, 0.0)

        def build_taps(src_ref, skip=None):
            # 9 shifted taps from the padded flat layout, cast at the store (bf16 scratch).
            for idx, s in enumerate(tap_offs):
                if skip is not None and idx == skip:
                    continue
                pt_ref[idx * C:(idx + 1) * C, :] = src_ref[:, s:s + NQ].astype(jnp.bfloat16)

        # ---- conv1: one wide (O, 9C) x (9C, NQ) MXU dot on bf16 operands ----
        center = x_ref[:, base:base + NQ]                  # f32, 128-aligned; also the residual
        pt_ref[4 * C:5 * C, :] = center.astype(jnp.bfloat16)   # center tap (kj = ki = 1)
        build_taps(x_ref, skip=4)
        y1 = jnp.dot(w1, pt_ref[...], preferred_element_type=jnp.float32)   # (O, NQ) f32

        # ---- BatchNorm2d (training batch stats over valid lanes), folded affine + ReLU ----
        ym = y1 * mask
        mean = jnp.sum(ym, axis=1, keepdims=True) * inv_cnt
        d = (y1 - mean) * mask
        var = jnp.sum(d * d, axis=1, keepdims=True) * inv_cnt   # centered (no cancellation)
        scale = lax.rsqrt(var + BN_EPS) * g_ref[...]
        bias = b_ref[...] - mean * scale
        act = jnp.maximum(y1 * scale + bias, 0.0) * mask
        # TODO(synk): BatchNorm running_mean/running_var buffer updates (train-mode side
        # effect) are not emitted; forward math only.

        # ---- re-embed activation on the padded flat grid; zero only head/tail rings ----
        z_ref[:, :base] = jnp.zeros((C, base), jnp.bfloat16)
        z_ref[:, tail:] = jnp.zeros((C, NTOT - tail), jnp.bfloat16)
        z_ref[:, base:tail] = act.astype(jnp.bfloat16)          # 128-aligned, full-sublane store

        # ---- conv2 + skip connection (residual reuses the f32 center tap) ----
        build_taps(z_ref)
        y2 = jnp.dot(w2, pt_ref[...], preferred_element_type=jnp.float32)
        o_ref[...] = y2 + center

    return kernel


# ---------------------------------- wrapper ------------------------------------

def pre_residual_fused(x, p_c1, q_level1, p_c2, q_level2, gamma, beta_bn):
    """relu(bn(conv1(x))) -> conv2 -> +x, with both convs' weight quantization, in ONE call."""
    B, C, H, W = x.shape
    O = C
    L = p_c1.shape[-1]
    K = p_c1.shape[2]
    HP, WP = H + 2, W + 2
    n_flat = B * HP * WP
    NQ = _round_up(n_flat, 128)
    off = (-(WP + 1)) % 128                   # left pad so center tap / act store are 128-aligned
    base = off + WP + 1
    NTOT = _round_up(off + NQ + 2 * WP + 2, 128)
    bn_count = B * H * W

    # Channel-major zero-padded flat input (C, NTOT): tiny wrapper glue, no HBM im2col.
    xpad = jnp.pad(x.astype(jnp.float32), ((0, 0), (0, 0), (1, 1), (1, 1)))
    xcf = jnp.transpose(xpad, (1, 0, 2, 3)).reshape(C, n_flat)
    xcf = jnp.pad(xcf, ((0, 0), (off, NTOT - off - n_flat)))

    # Quantization primitives laid out (L, 2O, 9C) with column order (kj, ki, c) matching
    # the in-kernel patches rows; per-level quant values as (L, 2O, 1).
    def perm(p):
        return jnp.transpose(p, (4, 0, 2, 3, 1)).reshape(L, O, K * K * C).astype(jnp.float32)

    p_all = jnp.concatenate([perm(p_c1), perm(p_c2)], axis=1)                       # (L, 2O, 9C)
    q_all = jnp.concatenate(
        [jnp.broadcast_to(q_level1.astype(jnp.float32).reshape(L, 1, 1), (L, O, 1)),
         jnp.broadcast_to(q_level2.astype(jnp.float32).reshape(L, 1, 1), (L, O, 1))],
        axis=1)                                                                     # (L, 2O, 1)

    kernel = _make_preres_kernel(C, O, L, H, W, HP, WP, NQ, NTOT, n_flat, bn_count, base, off)
    out_flat = pl.pallas_call(
        kernel,
        out_shape=jax.ShapeDtypeStruct((O, NQ), jnp.float32),
        grid=(1,),
        in_specs=[pl.BlockSpec((C, NTOT), lambda i: (0, 0)),
                  pl.BlockSpec((L, 2 * O, K * K * C), lambda i: (0, 0, 0)),
                  pl.BlockSpec((L, 2 * O, 1), lambda i: (0, 0, 0)),
                  pl.BlockSpec((C, 1), lambda i: (0, 0)),
                  pl.BlockSpec((C, 1), lambda i: (0, 0))],
        out_specs=pl.BlockSpec((O, NQ), lambda i: (0, 0)),
        scratch_shapes=[pltpu.VMEM((C, NTOT), jnp.bfloat16),     # re-padded activation
                        pltpu.VMEM((9 * C, NQ), jnp.bfloat16)],  # im2col patches
        compiler_params=pltpu.CompilerParams(dimension_semantics=("arbitrary",)),
        # TODO(synk): production sizes (large C, B*H*W) need an NQ-tiled grid with a
        # two-pass / grid-carried BN accumulator and explicit vmem_limit_bytes (v7x 64 MiB).
    )(xcf, p_all, q_all,
      gamma.reshape(C, 1).astype(jnp.float32),
      beta_bn.reshape(C, 1).astype(jnp.float32))

    # Extract valid positions: q = b*HP*WP + h*WP + w  ->  (B, O, H, W).
    out = out_flat[:, :n_flat].reshape(O, B, HP, WP)[:, :, :H, :W]
    return jnp.transpose(out, (1, 0, 2, 3))


@jax.jit
def pre_residual_forward(x, p_c1, q_level1, p_c2, q_level2, gamma, beta_bn):
    return pre_residual_fused(x, p_c1, q_level1, p_c2, q_level2, gamma, beta_bn)


# ----------------------------- pure-JAX reference -------------------------------

def reference_forward(x, p_c1, q1, p_c2, q2, gamma, beta_bn):
    def quant(p, q):
        norm = jnp.sqrt(jnp.sum(p ** 2, axis=-1, keepdims=True))
        pn = p / norm
        e = jnp.exp(BETA * pn)
        s = e / jnp.sum(e, axis=-1, keepdims=True)
        return jnp.matmul(s, q)

    def conv(xx, ww):
        return lax.conv_general_dilated(
            xx, ww, (1, 1), ((1, 1), (1, 1)),
            dimension_numbers=("NCHW", "OIHW", "NCHW"))

    w1, w2 = quant(p_c1, q1), quant(p_c2, q2)
    y = conv(x, w1)
    mean = jnp.mean(y, axis=(0, 2, 3), keepdims=True)
    var = jnp.mean((y - mean) ** 2, axis=(0, 2, 3), keepdims=True)
    y = (y - mean) / jnp.sqrt(var + BN_EPS)
    y = y * gamma.reshape(1, -1, 1, 1) + beta_bn.reshape(1, -1, 1, 1)
    y = jnp.maximum(y, 0.0)
    return conv(y, w2) + x


# ------------------------------------- main --------------------------------------

if __name__ == "__main__":
    B, C, H, W, L = 2, 4, 16, 16, NUM_LEVEL_CONV
    key = jax.random.PRNGKey(0)
    ks = jax.random.split(key, 5)

    x = jax.random.normal(ks[0], (B, C, H, W), jnp.float32)

    # MyConv2d params: p_c ~ normal (config.prim_init='normal'),
    # q_level ~ U(-bound, bound) with kaiming-style bound (reset_parameters()).
    p_c1 = jax.random.normal(ks[1], (C, C, 3, 3, L), jnp.float32)
    p_c2 = jax.random.normal(ks[2], (C, C, 3, 3, L), jnp.float32)
    fan_in = C * 3 * 3
    gain = math.sqrt(2.0 / (1.0 + 5.0))          # a = sqrt(5)
    bound = math.sqrt(3.0) * gain / math.sqrt(fan_in)
    q_level1 = jax.random.uniform(ks[3], (L,), jnp.float32, -bound, bound)
    q_level2 = jax.random.uniform(ks[4], (L,), jnp.float32, -bound, bound)

    # BatchNorm2d default affine init.
    gamma = jnp.ones((C,), jnp.float32)
    beta_bn = jnp.zeros((C,), jnp.float32)

    out = pre_residual_forward(x, p_c1, q_level1, p_c2, q_level2, gamma, beta_bn)
    out = jax.block_until_ready(out)

    ref = reference_forward(x, p_c1, q_level1, p_c2, q_level2, gamma, beta_bn)
    assert out.shape == (B, C, H, W)
    assert bool(jnp.allclose(out, ref, rtol=5e-2, atol=5e-2)), "mismatch vs reference"

    print("KERNEL_OK")
</pallas_src>

<mosaic_0001>
module attributes {stable_mosaic.version = 11 : i64} {
  func.func @kernel(%arg0: i32, %arg1: memref<4x1024xf32, #tpu.memory_space<vmem>>, %arg2: memref<4x8x36xf32, #tpu.memory_space<vmem>>, %arg3: memref<4x8x1xf32, #tpu.memory_space<vmem>>, %arg4: memref<4x1xf32, #tpu.memory_space<vmem>>, %arg5: memref<4x1xf32, #tpu.memory_space<vmem>>, %arg6: memref<4x768xf32, #tpu.memory_space<vmem>>, %arg7: memref<4x1024xbf16, #tpu.memory_space<vmem>>, %arg8: memref<36x768xbf16, #tpu.memory_space<vmem>>) attributes {dimension_semantics = [#tpu.dimension_semantics<arbitrary>], iteration_bounds = array<i64: 1>, scalar_prefetch = 0 : i64, scratch_operands = 2 : i64, tpu.core_type = #tpu.core_type<tc>, window_params = [{pipeline_mode = #tpu.pipeline_mode<synchronous>, transform_indices = @transform_0, window_bounds = array<i64: 4, 1024>}, {pipeline_mode = #tpu.pipeline_mode<synchronous>, transform_indices = @transform_1, window_bounds = array<i64: 4, 8, 36>}, {pipeline_mode = #tpu.pipeline_mode<synchronous>, transform_indices = @transform_2, window_bounds = array<i64: 4, 8, 1>}, {pipeline_mode = #tpu.pipeline_mode<synchronous>, transform_indices = @transform_3, window_bounds = array<i64: 4, 1>}, {pipeline_mode = #tpu.pipeline_mode<synchronous>, transform_indices = @transform_4, window_bounds = array<i64: 4, 1>}, {pipeline_mode = #tpu.pipeline_mode<synchronous>, transform_indices = @transform_5, window_bounds = array<i64: 4, 768>}]} {
    %c0 = arith.constant 0 : index
    %c0_0 = arith.constant 0 : index
    %c0_1 = arith.constant 0 : index
    %0 = vector.load %arg2[%c0, %c0_0, %c0_1] : memref<4x8x36xf32, #tpu.memory_space<vmem>>, vector<1x8x36xf32>
    %1 = vector.shape_cast %0 : vector<1x8x36xf32> to vector<8x36xf32>
    %c1 = arith.constant 1 : index
    %c0_2 = arith.constant 0 : index
    %c0_3 = arith.constant 0 : index
    %2 = vector.load %arg2[%c1, %c0_2, %c0_3] : memref<4x8x36xf32, #tpu.memory_space<vmem>>, vector<1x8x36xf32>
    %3 = vector.shape_cast %2 : vector<1x8x36xf32> to vector<8x36xf32>
    %c2 = arith.constant 2 : index
    %c0_4 = arith.constant 0 : index
    %c0_5 = arith.constant 0 : index
    %4 = vector.load %arg2[%c2, %c0_4, %c0_5] : memref<4x8x36xf32, #tpu.memory_space<vmem>>, vector<1x8x36xf32>
    %5 = vector.shape_cast %4 : vector<1x8x36xf32> to vector<8x36xf32>
    %c3 = arith.constant 3 : index
    %c0_6 = arith.constant 0 : index
    %c0_7 = arith.constant 0 : index
    %6 = vector.load %arg2[%c3, %c0_6, %c0_7] : memref<4x8x36xf32, #tpu.memory_space<vmem>>, vector<1x8x36xf32>
    %7 = vector.shape_cast %6 : vector<1x8x36xf32> to vector<8x36xf32>
    %8 = arith.mulf %1, %1 : vector<8x36xf32>
    %cst = arith.constant 0.000000e+00 : f32
    %9 = vector.broadcast %cst : f32 to vector<8x36xf32>
    %10 = arith.addf %9, %8 : vector<8x36xf32>
    %11 = arith.mulf %3, %3 : vector<8x36xf32>
    %12 = arith.addf %10, %11 : vector<8x36xf32>
    %13 = arith.mulf %5, %5 : vector<8x36xf32>
    %14 = arith.addf %12, %13 : vector<8x36xf32>
    %15 = arith.mulf %7, %7 : vector<8x36xf32>
    %16 = arith.addf %14, %15 : vector<8x36xf32>
    %17 = math.sqrt %16 : vector<8x36xf32>
    %cst_8 = arith.constant 1.000000e+00 : f32
    %18 = vector.broadcast %cst_8 : f32 to vector<8x36xf32>
    %19 = arith.mulf %18, %1 : vector<8x36xf32>
    %20 = arith.divf %19, %17 : vector<8x36xf32>
    %cst_9 = arith.constant 1.000000e+00 : f32
    %21 = vector.broadcast %cst_9 : f32 to vector<8x36xf32>
    %22 = arith.mulf %21, %3 : vector<8x36xf32>
    %23 = arith.divf %22, %17 : vector<8x36xf32>
    %cst_10 = arith.constant 1.000000e+00 : f32
    %24 = vector.broadcast %cst_10 : f32 to vector<8x36xf32>
    %25 = arith.mulf %24, %5 : vector<8x36xf32>
    %26 = arith.divf %25, %17 : vector<8x36xf32>
    %cst_11 = arith.constant 1.000000e+00 : f32
    %27 = vector.broadcast %cst_11 : f32 to vector<8x36xf32>
    %28 = arith.mulf %27, %7 : vector<8x36xf32>
    %29 = arith.divf %28, %17 : vector<8x36xf32>
    %30 = arith.maximumf %20, %23 : vector<8x36xf32>
    %31 = arith.maximumf %30, %26 : vector<8x36xf32>
    %32 = arith.maximumf %31, %29 : vector<8x36xf32>
    %33 = arith.subf %20, %32 : vector<8x36xf32>
    %34 = math.exp %33 : vector<8x36xf32>
    %35 = arith.subf %23, %32 : vector<8x36xf32>
    %36 = math.exp %35 : vector<8x36xf32>
    %37 = arith.subf %26, %32 : vector<8x36xf32>
    %38 = math.exp %37 : vector<8x36xf32>
    %39 = arith.subf %29, %32 : vector<8x36xf32>
    %40 = math.exp %39 : vector<8x36xf32>
    %cst_12 = arith.constant 0.000000e+00 : f32
    %41 = vector.broadcast %cst_12 : f32 to vector<8x36xf32>
    %42 = arith.addf %41, %34 : vector<8x36xf32>
    %43 = arith.addf %42, %36 : vector<8x36xf32>
    %44 = arith.addf %43, %38 : vector<8x36xf32>
    %45 = arith.addf %44, %40 : vector<8x36xf32>
    %c0_13 = arith.constant 0 : index
    %c0_14 = arith.constant 0 : index
    %c0_15 = arith.constant 0 : index
    %46 = vector.load %arg3[%c0_13, %c0_14, %c0_15] : memref<4x8x1xf32, #tpu.memory_space<vmem>>, vector<1x8x1xf32>
    %47 = vector.shape_cast %46 : vector<1x8x1xf32> to vector<8x1xf32>
    %48 = vector.broadcast %47 : vector<8x1xf32> to vector<8x36xf32>
    %49 = arith.mulf %34, %48 : vector<8x36xf32>
    %cst_16 = arith.constant 0.000000e+00 : f32
    %50 = vector.broadcast %cst_16 : f32 to vector<8x36xf32>
    %51 = arith.addf %50, %49 : vector<8x36xf32>
    %c1_17 = arith.constant 1 : index
    %c0_18 = arith.constant 0 : index
    %c0_19 = arith.constant 0 : index
    %52 = vector.load %arg3[%c1_17, %c0_18, %c0_19] : memref<4x8x1xf32, #tpu.memory_space<vmem>>, vector<1x8x1xf32>
    %53 = vector.shape_cast %52 : vector<1x8x1xf32> to vector<8x1xf32>
    %54 = vector.broadcast %53 : vector<8x1xf32> to vector<8x36xf32>
    %55 = arith.mulf %36, %54 : vector<8x36xf32>
    %56 = arith.addf %51, %55 : vector<8x36xf32>
    %c2_20 = arith.constant 2 : index
    %c0_21 = arith.constant 0 : index
    %c0_22 = arith.constant 0 : index
    %57 = vector.load %arg3[%c2_20, %c0_21, %c0_22] : memref<4x8x1xf32, #tpu.memory_space<vmem>>, vector<1x8x1xf32>
    %58 = vector.shape_cast %57 : vector<1x8x1xf32> to vector<8x1xf32>
    %59 = vector.broadcast %58 : vector<8x1xf32> to vector<8x36xf32>
    %60 = arith.mulf %38, %59 : vector<8x36xf32>
    %61 = arith.addf %56, %60 : vector<8x36xf32>
    %c3_23 = arith.constant 3 : index
    %c0_24 = arith.constant 0 : index
    %c0_25 = arith.constant 0 : index
    %62 = vector.load %arg3[%c3_23, %c0_24, %c0_25] : memref<4x8x1xf32, #tpu.memory_space<vmem>>, vector<1x8x1xf32>
    %63 = vector.shape_cast %62 : vector<1x8x1xf32> to vector<8x1xf32>
    %64 = vector.broadcast %63 : vector<8x1xf32> to vector<8x36xf32>
    %65 = arith.mulf %40, %64 : vector<8x36xf32>
    %66 = arith.addf %61, %65 : vector<8x36xf32>
    %67 = arith.divf %66, %45 : vector<8x36xf32>
    %68 = vector.extract_strided_slice %67 {offsets = [0, 0], sizes = [4, 36], strides = [1, 1]} : vector<8x36xf32> to vector<4x36xf32>
    %69 = arith.truncf %68 : vector<4x36xf32> to vector<4x36xbf16>
    %70 = vector.extract_strided_slice %67 {offsets = [4, 0], sizes = [4, 36], strides = [1, 1]} : vector<8x36xf32> to vector<4x36xf32>
    %71 = arith.truncf %70 : vector<4x36xf32> to vector<4x36xbf16>
    %72 = tpu.iota {dimensions = array<i32: 1>} : vector<1x768xi32>
    %73 = arith.sitofp %72 : vector<1x768xi32> to vector<1x768xf32>
    %cst_26 = arith.constant 0.00308641978 : f32
    %74 = vector.broadcast %cst_26 : f32 to vector<1x768xf32>
    %75 = arith.mulf %73, %74 : vector<1x768xf32>
    %cst_27 = arith.constant 9.99999974E-6 : f32
    %76 = vector.broadcast %cst_27 : f32 to vector<1x768xf32>
    %77 = arith.addf %75, %76 : vector<1x768xf32>
    %78 = math.floor %77 : vector<1x768xf32>
    %cst_28 = arith.constant 3.240000e+02 : f32
    %79 = vector.broadcast %cst_28 : f32 to vector<1x768xf32>
    %80 = arith.mulf %78, %79 : vector<1x768xf32>
    %81 = arith.subf %73, %80 : vector<1x768xf32>
    %cst_29 = arith.constant 0.055555556 : f32
    %82 = vector.broadcast %cst_29 : f32 to vector<1x768xf32>
    %83 = arith.mulf %81, %82 : vector<1x768xf32>
    %cst_30 = arith.constant 9.99999974E-6 : f32
    %84 = vector.broadcast %cst_30 : f32 to vector<1x768xf32>
    %85 = arith.addf %83, %84 : vector<1x768xf32>
    %86 = math.floor %85 : vector<1x768xf32>
    %cst_31 = arith.constant 1.800000e+01 : f32
    %87 = vector.broadcast %cst_31 : f32 to vector<1x768xf32>
    %88 = arith.mulf %86, %87 : vector<1x768xf32>
    %89 = arith.subf %81, %88 : vector<1x768xf32>
    %cst_32 = arith.constant 6.480000e+02 : f32
    %90 = vector.broadcast %cst_32 : f32 to vector<1x768xf32>
    %91 = arith.cmpf olt, %73, %90 : vector<1x768xf32>
    %cst_33 = arith.constant 1.600000e+01 : f32
    %92 = vector.broadcast %cst_33 : f32 to vector<1x768xf32>
    %93 = arith.cmpf olt, %86, %92 : vector<1x768xf32>
    %94 = arith.andi %91, %93 : vector<1x768xi1>
    %cst_34 = arith.constant 1.600000e+01 : f32
    %95 = vector.broadcast %cst_34 : f32 to vector<1x768xf32>
    %96 = arith.cmpf olt, %89, %95 : vector<1x768xf32>
    %97 = arith.andi %94, %96 : vector<1x768xi1>
    %cst_35 = arith.constant 1.000000e+00 : f32
    %cst_36 = arith.constant 0.000000e+00 : f32
    %98 = vector.broadcast %cst_35 : f32 to vector<1x768xf32>
    %99 = vector.broadcast %cst_36 : f32 to vector<1x768xf32>
    %100 = arith.select %97, %98, %99 : vector<1x768xi1>, vector<1x768xf32>
    %c0_37 = arith.constant 0 : index
    %c128 = arith.constant 128 : index
    %101 = vector.load %arg1[%c0_37, %c128] : memref<4x1024xf32, #tpu.memory_space<vmem>>, vector<4x768xf32>
    %102 = arith.truncf %101 : vector<4x768xf32> to vector<4x768xbf16>
    %c16 = arith.constant 16 : index
    %c0_38 = arith.constant 0 : index
    %103 = vector.load %arg8[%c16, %c0_38] : memref<36x768xbf16, #tpu.memory_space<vmem>>, vector<4x768xbf16>
    tpu.vector_store %arg8[%c16, %c0_38], %102 {strides = array<i32>} : memref<36x768xbf16, #tpu.memory_space<vmem>>, vector<4x768xbf16>,
    %c0_39 = arith.constant 0 : index
    %c109 = arith.constant 109 : index
    %104 = vector.load %arg1[%c0_39, %c109] : memref<4x1024xf32, #tpu.memory_space<vmem>>, vector<4x768xf32>
    %105 = arith.truncf %104 : vector<4x768xf32> to vector<4x768xbf16>
    %c0_40 = arith.constant 0 : index
    %c0_41 = arith.constant 0 : index
    %106 = vector.load %arg8[%c0_40, %c0_41] : memref<36x768xbf16, #tpu.memory_space<vmem>>, vector<4x768xbf16>
    tpu.vector_store %arg8[%c0_40, %c0_41], %105 {strides = array<i32>} : memref<36x768xbf16, #tpu.memory_space<vmem>>, vector<4x768xbf16>,
    %c0_42 = arith.constant 0 : index
    %c110 = arith.constant 110 : index
    %107 = vector.load %arg1[%c0_42, %c110] : memref<4x1024xf32, #tpu.memory_space<vmem>>, vector<4x768xf32>
    %108 = arith.truncf %107 : vector<4x768xf32> to vector<4x768xbf16>
    %c4 = arith.constant 4 : index
    %c0_43 = arith.constant 0 : index
    %109 = vector.load %arg8[%c4, %c0_43] : memref<36x768xbf16, #tpu.memory_space<vmem>>, vector<4x768xbf16>
    tpu.vector_store %arg8[%c4, %c0_43], %108 {strides = array<i32>} : memref<36x768xbf16, #tpu.memory_space<vmem>>, vector<4x768xbf16>,
    %c0_44 = arith.constant 0 : index
    %c111 = arith.constant 111 : index
    %110 = vector.load %arg1[%c0_44, %c111] : memref<4x1024xf32, #tpu.memory_space<vmem>>, vector<4x768xf32>
    %111 = arith.truncf %110 : vector<4x768xf32> to vector<4x768xbf16>
    %c8 = arith.constant 8 : index
    %c0_45 = arith.constant 0 : index
    %112 = vector.load %arg8[%c8, %c0_45] : memref<36x768xbf16, #tpu.memory_space<vmem>>, vector<4x768xbf16>
    tpu.vector_store %arg8[%c8, %c0_45], %111 {strides = array<i32>} : memref<36x768xbf16, #tpu.memory_space<vmem>>, vector<4x768xbf16>,
    %c0_46 = arith.constant 0 : index
    %c127 = arith.constant 127 : index
    %113 = vector.load %arg1[%c0_46, %c127] : memref<4x1024xf32, #tpu.memory_space<vmem>>, vector<4x768xf32>
    %114 = arith.truncf %113 : vector<4x768xf32> to vector<4x768xbf16>
    %c12 = arith.constant 12 : index
    %c0_47 = arith.constant 0 : index
    %115 = vector.load %arg8[%c12, %c0_47] : memref<36x768xbf16, #tpu.memory_space<vmem>>, vector<4x768xbf16>
    tpu.vector_store %arg8[%c12, %c0_47], %114 {strides = array<i32>} : memref<36x768xbf16, #tpu.memory_space<vmem>>, vector<4x768xbf16>,
    %c0_48 = arith.constant 0 : index
    %c129 = arith.constant 129 : index
    %116 = vector.load %arg1[%c0_48, %c129] : memref<4x1024xf32, #tpu.memory_space<vmem>>, vector<4x768xf32>
    %117 = arith.truncf %116 : vector<4x768xf32> to vector<4x768xbf16>
    %c20 = arith.constant 20 : index
    %c0_49 = arith.constant 0 : index
    %118 = vector.load %arg8[%c20, %c0_49] : memref<36x768xbf16, #tpu.memory_space<vmem>>, vector<4x768xbf16>
    tpu.vector_store %arg8[%c20, %c0_49], %117 {strides = array<i32>} : memref<36x768xbf16, #tpu.memory_space<vmem>>, vector<4x768xbf16>,
    %c0_50 = arith.constant 0 : index
    %c145 = arith.constant 145 : index
    %119 = vector.load %arg1[%c0_50, %c145] : memref<4x1024xf32, #tpu.memory_space<vmem>>, vector<4x768xf32>
    %120 = arith.truncf %119 : vector<4x768xf32> to vector<4x768xbf16>
    %c24 = arith.constant 24 : index
    %c0_51 = arith.constant 0 : index
    %121 = vector.load %arg8[%c24, %c0_51] : memref<36x768xbf16, #tpu.memory_space<vmem>>, vector<4x768xbf16>
    tpu.vector_store %arg8[%c24, %c0_51], %120 {strides = array<i32>} : memref<36x768xbf16, #tpu.memory_space<vmem>>, vector<4x768xbf16>,
    %c0_52 = arith.constant 0 : index
    %c146 = arith.constant 146 : index
    %122 = vector.load %arg1[%c0_52, %c146] : memref<4x1024xf32, #tpu.memory_space<vmem>>, vector<4x768xf32>
    %123 = arith.truncf %122 : vector<4x768xf32> to vector<4x768xbf16>
    %c28 = arith.constant 28 : index
    %c0_53 = arith.constant 0 : index
    %124 = vector.load %arg8[%c28, %c0_53] : memref<36x768xbf16, #tpu.memory_space<vmem>>, vector<4x768xbf16>
    tpu.vector_store %arg8[%c28, %c0_53], %123 {strides = array<i32>} : memref<36x768xbf16, #tpu.memory_space<vmem>>, vector<4x768xbf16>,
    %c0_54 = arith.constant 0 : index
    %c147 = arith.constant 147 : index
    %125 = vector.load %arg1[%c0_54, %c147] : memref<4x1024xf32, #tpu.memory_space<vmem>>, vector<4x768xf32>
    %126 = arith.truncf %125 : vector<4x768xf32> to vector<4x768xbf16>
    %c32 = arith.constant 32 : index
    %c0_55 = arith.constant 0 : index
    %127 = vector.load %arg8[%c32, %c0_55] : memref<36x768xbf16, #tpu.memory_space<vmem>>, vector<4x768xbf16>
    tpu.vector_store %arg8[%c32, %c0_55], %126 {strides = array<i32>} : memref<36x768xbf16, #tpu.memory_space<vmem>>, vector<4x768xbf16>,
    %c0_56 = arith.constant 0 : index
    %c0_57 = arith.constant 0 : index
    %128 = vector.load %arg8[%c0_56, %c0_57] : memref<36x768xbf16, #tpu.memory_space<vmem>>, vector<36x768xbf16>
    %cst_58 = arith.constant dense<0.000000e+00> : vector<4x768xf32>
    %129 = tpu.matmul %69, %128, %cst_58 {dimension_numbers = #tpu.dot_dimension_numbers<[1], [0], [0], [1], [0, 0, 1, 1], [], []>} : vector<4x36xbf16>, vector<36x768xbf16>, vector<4x768xf32> -> vector<4x768xf32>
    %130 = vector.broadcast %100 : vector<1x768xf32> to vector<4x768xf32>
    %131 = arith.mulf %129, %130 : vector<4x768xf32>
    %cst_59 = arith.constant dense<0.000000e+00> : vector<4xf32>
    %132 = vector.multi_reduction <add>, %131, %cst_59 [1] : vector<4x768xf32> to vector<4xf32>
    %133 = vector.shape_cast %132 : vector<4xf32> to vector<4x1xf32>
    %cst_60 = arith.constant 0.001953125 : f32
    %134 = vector.broadcast %cst_60 : f32 to vector<4x1xf32>
    %135 = arith.mulf %133, %134 : vector<4x1xf32>
    %136 = vector.broadcast %135 : vector<4x1xf32> to vector<4x768xf32>
    %137 = arith.subf %129, %136 : vector<4x768xf32>
    %138 = vector.broadcast %100 : vector<1x768xf32> to vector<4x768xf32>
    %139 = arith.mulf %137, %138 : vector<4x768xf32>
    %140 = arith.mulf %139, %139 : vector<4x768xf32>
    %cst_61 = arith.constant dense<0.000000e+00> : vector<4xf32>
    %141 = vector.multi_reduction <add>, %140, %cst_61 [1] : vector<4x768xf32> to vector<4xf32>
    %142 = vector.shape_cast %141 : vector<4xf32> to vector<4x1xf32>
    %cst_62 = arith.constant 0.001953125 : f32
    %143 = vector.broadcast %cst_62 : f32 to vector<4x1xf32>
    %144 = arith.mulf %142, %143 : vector<4x1xf32>
    %cst_63 = arith.constant 9.99999974E-6 : f32
    %145 = vector.broadcast %cst_63 : f32 to vector<4x1xf32>
    %146 = arith.addf %144, %145 : vector<4x1xf32>
    %147 = math.rsqrt %146 : vector<4x1xf32>
    %c0_64 = arith.constant 0 : index
    %c0_65 = arith.constant 0 : index
    %148 = vector.load %arg4[%c0_64, %c0_65] : memref<4x1xf32, #tpu.memory_space<vmem>>, vector<4x1xf32>
    %149 = arith.mulf %147, %148 : vector<4x1xf32>
    %c0_66 = arith.constant 0 : index
    %c0_67 = arith.constant 0 : index
    %150 = vector.load %arg5[%c0_66, %c0_67] : memref<4x1xf32, #tpu.memory_space<vmem>>, vector<4x1xf32>
    %151 = arith.mulf %135, %149 : vector<4x1xf32>
    %152 = arith.subf %150, %151 : vector<4x1xf32>
    %153 = vector.broadcast %149 : vector<4x1xf32> to vector<4x768xf32>
    %154 = arith.mulf %129, %153 : vector<4x768xf32>
    %155 = vector.broadcast %152 : vector<4x1xf32> to vector<4x768xf32>
    %156 = arith.addf %154, %155 : vector<4x768xf32>
    %cst_68 = arith.constant 0.000000e+00 : f32
    %157 = vector.broadcast %cst_68 : f32 to vector<4x768xf32>
    %158 = arith.maximumf %156, %157 : vector<4x768xf32>
    %159 = vector.broadcast %100 : vector<1x768xf32> to vector<4x768xf32>
    %160 = arith.mulf %158, %159 : vector<4x768xf32>
    %cst_69 = arith.constant 0.000000e+00 : bf16
    %161 = vector.broadcast %cst_69 : bf16 to vector<4x128xbf16>
    %c0_70 = arith.constant 0 : index
    %c0_71 = arith.constant 0 : index
    %162 = vector.load %arg7[%c0_70, %c0_71] : memref<4x1024xbf16, #tpu.memory_space<vmem>>, vector<4x128xbf16>
    tpu.vector_store %arg7[%c0_70, %c0_71], %161 {strides = array<i32>} : memref<4x1024xbf16, #tpu.memory_space<vmem>>, vector<4x128xbf16>,
    %cst_72 = arith.constant 0.000000e+00 : bf16
    %163 = vector.broadcast %cst_72 : bf16 to vector<4x128xbf16>
    %c0_73 = arith.constant 0 : index
    %c896 = arith.constant 896 : index
    %164 = vector.load %arg7[%c0_73, %c896] : memref<4x1024xbf16, #tpu.memory_space<vmem>>, vector<4x128xbf16>
    tpu.vector_store %arg7[%c0_73, %c896], %163 {strides = array<i32>} : memref<4x1024xbf16, #tpu.memory_space<vmem>>, vector<4x128xbf16>,
    %165 = arith.truncf %160 : vector<4x768xf32> to vector<4x768xbf16>
    %c0_74 = arith.constant 0 : index
    %c128_75 = arith.constant 128 : index
    %166 = vector.load %arg7[%c0_74, %c128_75] : memref<4x1024xbf16, #tpu.memory_space<vmem>>, vector<4x768xbf16>
    tpu.vector_store %arg7[%c0_74, %c128_75], %165 {strides = array<i32>} : memref<4x1024xbf16, #tpu.memory_space<vmem>>, vector<4x768xbf16>,
    %c0_76 = arith.constant 0 : index
    %c109_77 = arith.constant 109 : index
    %167 = vector.load %arg7[%c0_76, %c109_77] : memref<4x1024xbf16, #tpu.memory_space<vmem>>, vector<4x768xbf16>
    %c0_78 = arith.constant 0 : index
    %c0_79 = arith.constant 0 : index
    %168 = vector.load %arg8[%c0_78, %c0_79] : memref<36x768xbf16, #tpu.memory_space<vmem>>, vector<4x768xbf16>
    tpu.vector_store %arg8[%c0_78, %c0_79], %167 {strides = array<i32>} : memref<36x768xbf16, #tpu.memory_space<vmem>>, vector<4x768xbf16>,
    %c0_80 = arith.constant 0 : index
    %c110_81 = arith.constant 110 : index
    %169 = vector.load %arg7[%c0_80, %c110_81] : memref<4x1024xbf16, #tpu.memory_space<vmem>>, vector<4x768xbf16>
    %c4_82 = arith.constant 4 : index
    %c0_83 = arith.constant 0 : index
    %170 = vector.load %arg8[%c4_82, %c0_83] : memref<36x768xbf16, #tpu.memory_space<vmem>>, vector<4x768xbf16>
    tpu.vector_store %arg8[%c4_82, %c0_83], %169 {strides = array<i32>} : memref<36x768xbf16, #tpu.memory_space<vmem>>, vector<4x768xbf16>,
    %c0_84 = arith.constant 0 : index
    %c111_85 = arith.constant 111 : index
    %171 = vector.load %arg7[%c0_84, %c111_85] : memref<4x1024xbf16, #tpu.memory_space<vmem>>, vector<4x768xbf16>
    %c8_86 = arith.constant 8 : index
    %c0_87 = arith.constant 0 : index
    %172 = vector.load %arg8[%c8_86, %c0_87] : memref<36x768xbf16, #tpu.memory_space<vmem>>, vector<4x768xbf16>
    tpu.vector_store %arg8[%c8_86, %c0_87], %171 {strides = array<i32>} : memref<36x768xbf16, #tpu.memory_space<vmem>>, vector<4x768xbf16>,
    %c0_88 = arith.constant 0 : index
    %c127_89 = arith.constant 127 : index
    %173 = vector.load %arg7[%c0_88, %c127_89] : memref<4x1024xbf16, #tpu.memory_space<vmem>>, vector<4x768xbf16>
    %c12_90 = arith.constant 12 : index
    %c0_91 = arith.constant 0 : index
    %174 = vector.load %arg8[%c12_90, %c0_91] : memref<36x768xbf16, #tpu.memory_space<vmem>>, vector<4x768xbf16>
    tpu.vector_store %arg8[%c12_90, %c0_91], %173 {strides = array<i32>} : memref<36x768xbf16, #tpu.memory_space<vmem>>, vector<4x768xbf16>,
    %c0_92 = arith.constant 0 : index
    %c128_93 = arith.constant 128 : index
    %175 = vector.load %arg7[%c0_92, %c128_93] : memref<4x1024xbf16, #tpu.memory_space<vmem>>, vector<4x768xbf16>
    %c16_94 = arith.constant 16 : index
    %c0_95 = arith.constant 0 : index
    %176 = vector.load %arg8[%c16_94, %c0_95] : memref<36x768xbf16, #tpu.memory_space<vmem>>, vector<4x768xbf16>
    tpu.vector_store %arg8[%c16_94, %c0_95], %175 {strides = array<i32>} : memref<36x768xbf16, #tpu.memory_space<vmem>>, vector<4x768xbf16>,
    %c0_96 = arith.constant 0 : index
    %c129_97 = arith.constant 129 : index
    %177 = vector.load %arg7[%c0_96, %c129_97] : memref<4x1024xbf16, #tpu.memory_space<vmem>>, vector<4x768xbf16>
    %c20_98 = arith.constant 20 : index
    %c0_99 = arith.constant 0 : index
    %178 = vector.load %arg8[%c20_98, %c0_99] : memref<36x768xbf16, #tpu.memory_space<vmem>>, vector<4x768xbf16>
    tpu.vector_store %arg8[%c20_98, %c0_99], %177 {strides = array<i32>} : memref<36x768xbf16, #tpu.memory_space<vmem>>, vector<4x768xbf16>,
    %c0_100 = arith.constant 0 : index
    %c145_101 = arith.constant 145 : index
    %179 = vector.load %arg7[%c0_100, %c145_101] : memref<4x1024xbf16, #tpu.memory_space<vmem>>, vector<4x768xbf16>
    %c24_102 = arith.constant 24 : index
    %c0_103 = arith.constant 0 : index
    %180 = vector.load %arg8[%c24_102, %c0_103] : memref<36x768xbf16, #tpu.memory_space<vmem>>, vector<4x768xbf16>
    tpu.vector_store %arg8[%c24_102, %c0_103], %179 {strides = array<i32>} : memref<36x768xbf16, #tpu.memory_space<vmem>>, vector<4x768xbf16>,
    %c0_104 = arith.constant 0 : index
    %c146_105 = arith.constant 146 : index
    %181 = vector.load %arg7[%c0_104, %c146_105] : memref<4x1024xbf16, #tpu.memory_space<vmem>>, vector<4x768xbf16>
    %c28_106 = arith.constant 28 : index
    %c0_107 = arith.constant 0 : index
    %182 = vector.load %arg8[%c28_106, %c0_107] : memref<36x768xbf16, #tpu.memory_space<vmem>>, vector<4x768xbf16>
    tpu.vector_store %arg8[%c28_106, %c0_107], %181 {strides = array<i32>} : memref<36x768xbf16, #tpu.memory_space<vmem>>, vector<4x768xbf16>,
    %c0_108 = arith.constant 0 : index
    %c147_109 = arith.constant 147 : index
    %183 = vector.load %arg7[%c0_108, %c147_109] : memref<4x1024xbf16, #tpu.memory_space<vmem>>, vector<4x768xbf16>
    %c32_110 = arith.constant 32 : index
    %c0_111 = arith.constant 0 : index
    %184 = vector.load %arg8[%c32_110, %c0_111] : memref<36x768xbf16, #tpu.memory_space<vmem>>, vector<4x768xbf16>
    tpu.vector_store %arg8[%c32_110, %c0_111], %183 {strides = array<i32>} : memref<36x768xbf16, #tpu.memory_space<vmem>>, vector<4x768xbf16>,
    %c0_112 = arith.constant 0 : index
    %c0_113 = arith.constant 0 : index
    %185 = vector.load %arg8[%c0_112, %c0_113] : memref<36x768xbf16, #tpu.memory_space<vmem>>, vector<36x768xbf16>
    %cst_114 = arith.constant dense<0.000000e+00> : vector<4x768xf32>
    %186 = tpu.matmul %71, %185, %cst_114 {dimension_numbers = #tpu.dot_dimension_numbers<[1], [0], [0], [1], [0, 0, 1, 1], [], []>} : vector<4x36xbf16>, vector<36x768xbf16>, vector<4x768xf32> -> vector<4x768xf32>
    %187 = arith.addf %186, %101 : vector<4x768xf32>
    %c0_115 = arith.constant 0 : index
    %c0_116 = arith.constant 0 : index
    %188 = vector.load %arg6[%c0_115, %c0_116] : memref<4x768xf32, #tpu.memory_space<vmem>>, vector<4x768xf32>
    tpu.vector_store %arg6[%c0_115, %c0_116], %187 {strides = array<i32>} : memref<4x768xf32, #tpu.memory_space<vmem>>, vector<4x768xf32>,
    return
  }
  func.func @transform_0(%arg0: i32) -> (i32, i32) {
    %c0_i32 = arith.constant 0 : i32
    %c0_i32_0 = arith.constant 0 : i32
    %c0_i32_1 = arith.constant 0 : i32
    return %c0_i32, %c0_i32_0 : i32, i32
  }
  func.func @transform_1(%arg0: i32) -> (i32, i32, i32) {
    %c0_i32 = arith.constant 0 : i32
    %c0_i32_0 = arith.constant 0 : i32
    %c0_i32_1 = arith.constant 0 : i32
    %c0_i32_2 = arith.constant 0 : i32
    return %c0_i32, %c0_i32_0, %c0_i32_1 : i32, i32, i32
  }
  func.func @transform_2(%arg0: i32) -> (i32, i32, i32) {
    %c0_i32 = arith.constant 0 : i32
    %c0_i32_0 = arith.constant 0 : i32
    %c0_i32_1 = arith.constant 0 : i32
    %c0_i32_2 = arith.constant 0 : i32
    return %c0_i32, %c0_i32_0, %c0_i32_1 : i32, i32, i32
  }
  func.func @transform_3(%arg0: i32) -> (i32, i32) {
    %c0_i32 = arith.constant 0 : i32
    %c0_i32_0 = arith.constant 0 : i32
    %c0_i32_1 = arith.constant 0 : i32
    return %c0_i32, %c0_i32_0 : i32, i32
  }
  func.func @transform_4(%arg0: i32) -> (i32, i32) {
    %c0_i32 = arith.constant 0 : i32
    %c0_i32_0 = arith.constant 0 : i32
    %c0_i32_1 = arith.constant 0 : i32
    return %c0_i32, %c0_i32_0 : i32, i32
  }
  func.func @transform_5(%arg0: i32) -> (i32, i32) {
    %c0_i32 = arith.constant 0 : i32
    %c0_i32_0 = arith.constant 0 : i32
    %c0_i32_1 = arith.constant 0 : i32
    return %c0_i32, %c0_i32_0 : i32, i32
  }
}

</mosaic_0001>

<llo_original>
// kernel: pre_residual_forward.1
$region0: #{pre_residual_forward.1}
  #allocation0 [shape = 'u32[]', space=smem, size = 0x4, offset = 0x4, fixed_abs, tag = 'smem constant byte address 0x4 - core index']
  #allocation1 [shape = 'u32[72,128]{1,0:T(1,128)}', space=vmem, size = 0x9000, scoped, tag = 'internal scratch']
  #allocation2 [shape = 'bf16[4,1024]{1,0:T(4,128)(2,1)}', space=vmem, size = 0x2000, scoped, tag = 'scratch operand']
  #allocation3 [shape = 'bf16[36,768]{1,0:T(8,128)(2,1)}', space=vmem, size = 0xf000, scoped, tag = 'scratch operand']
  %s0 = inlined_call_operand.vmem [shape: f32[4,1024], index: 0, kind: input, shape index: {}]
  %s1 = inlined_call_operand.vmem [shape: f32[4,8,36], index: 1, kind: input, shape index: {}]
  %s2 = inlined_call_operand.vmem [shape: f32[4,8,1], index: 2, kind: input, shape index: {}]
  %s3 = inlined_call_operand.vmem [shape: f32[4,1], index: 3, kind: input, shape index: {}]
  %s4 = inlined_call_operand.vmem [shape: f32[4,1], index: 4, kind: input, shape index: {}]
  %s5 = inlined_call_operand.vmem [shape: f32[4,768], index: 5, kind: output, shape index: {}]
  %s6 = sld [smem:[#allocation0]]
  $region30: #{pre_residual_forward.1} parent=0
    _
  %s8 = ssub.s32 1, %s6
  %s9 = scalar_select 0, %s8, %s6
  // Predicated region
  $region2: #{pre_residual_forward.1} parent=0 // pred_check
    _
  $region3: #{pre_residual_forward.1} parent=0 // pred_check_branch
    %11 = sbr.rel (0) target = $region5
  $region4: #{pre_residual_forward.1} parent=0 // pred_region
    _
  $region5: #{pre_residual_forward.1} parent=0 // pred_fallthru
    _
  // Predicated region
  $region6: #{pre_residual_forward.1} parent=0 // pred_check
    _
  $region7: #{pre_residual_forward.1} parent=0 // pred_check_branch
    %13 = sbr.rel (0) target = $region9
  $region8: #{pre_residual_forward.1} parent=0 // pred_region
    _
  $region9: #{pre_residual_forward.1} parent=0 // pred_fallthru
    _
  // Predicated region
  $region10: #{pre_residual_forward.1} parent=0 // pred_check
    _
  $region11: #{pre_residual_forward.1} parent=0 // pred_check_branch
    %15 = sbr.rel (0) target = $region13
  $region12: #{pre_residual_forward.1} parent=0 // pred_region
    _
  $region13: #{pre_residual_forward.1} parent=0 // pred_fallthru
    _
  // Predicated region
  $region14: #{pre_residual_forward.1} parent=0 // pred_check
    _
  $region15: #{pre_residual_forward.1} parent=0 // pred_check_branch
    %17 = sbr.rel (0) target = $region17
  $region16: #{pre_residual_forward.1} parent=0 // pred_region
    _
  $region17: #{pre_residual_forward.1} parent=0 // pred_fallthru
    _
  // Predicated region
  $region18: #{pre_residual_forward.1} parent=0 // pred_check
    _
  $region19: #{pre_residual_forward.1} parent=0 // pred_check_branch
    %19 = sbr.rel (0) target = $region21
  $region20: #{pre_residual_forward.1} parent=0 // pred_region
    _
  $region21: #{pre_residual_forward.1} parent=0 // pred_fallthru
    _
  %v21 = vld [vmem:[%s1] sm:$0xff]
  %s22 = scalar_lea.vmem %s1, 8
  %v23 = vld [vmem:[%s22] sm:$0xff]
  %s24 = scalar_lea.vmem %s1, 16
  %v25 = vld [vmem:[%s24] sm:$0xff]
  %s26 = scalar_lea.vmem %s1, 24
  %v27 = vld [vmem:[%s26] sm:$0xff]
  %v28 = vmul.f32 %v21, %v21
  %v29 = vadd.f32 %v28, 0.0
  %v30 = vmul.f32 %v23, %v23
  %v31 = vadd.f32 %v29, %v30
  %v32 = vmul.f32 %v25, %v25
  %v33 = vadd.f32 %v31, %v32
  %v34 = vmul.f32 %v27, %v27
  %v35 = vadd.f32 %v33, %v34
  %v36 = vrsqrt.pop %v35
  %v37 = vmul.f32 %v36, %v35
  %v38 = vmul.f32 %v37, %v36
  %v39 = vmul.f32 0.5, %v38
  %v40 = vsub.f32 1.5, %v39
  %v41 = vmul.f32 %v36, %v40
  %v42 = vmul.f32 %v35, %v41
  %vm43 = vcmp.eq.f32.partialorder %v35, inf
  %v44 = vsel %vm43, %v35, %v42
  %vm45 = vcmp.eq.f32.partialorder %v35, 0.0
  %v46 = vand.u32 %v35, 2147483648
  %v47 = vsel %vm45, %v46, %v44
  %v48 = vrcp.pop %v47
  %v49 = vmul.f32 %v47, %v48
  %v50 = vsub.f32 1.0, %v49
  %v51 = vmul.f32 %v48, %v50
  %v52 = vadd.f32 %v48, %v51
  %vm53 = vweird.f32 %v47
  %vm54 = vweird.f32 %v48
  %vm55 = vmor %vm53, %vm54
  %v56 = vsel %vm55, %v48, %v52
  %v57 = vand.u32 2147483647, %v47
  %vm58 = vcmp.eq.f32.partialorder %v57, 8.507059e+37
  %v59 = vand.u32 %v47, 2147483648
  %v60 = vor.u32 1.1754944e-38, %v59
  %v61 = vsel %vm58, %v60, %v56
  %v62 = vmul.f32 %v21, %v61
  %v63 = vmul.f32 %v23, %v61
  %v64 = vmul.f32 %v25, %v61
  %v65 = vmul.f32 %v27, %v61
  %v66 = vmax.f32 %v62, %v63
  %v67 = vmax.f32 %v66, %v64
  %v68 = vmax.f32 %v67, %v65
  %v69 = vsub.f32 %v62, %v68
  %v70 = vmul.f32 %v69, 1.442695
  %v71 = vpow.pop %v70
  %v72 = vsub.f32 %v63, %v68
  %v73 = vmul.f32 %v72, 1.442695
  %v74 = vpow.pop %v73
  %v75 = vsub.f32 %v64, %v68
  %v76 = vmul.f32 %v75, 1.442695
  %v77 = vpow.pop %v76
  %v78 = vsub.f32 %v65, %v68
  %v79 = vmul.f32 %v78, 1.442695
  %v80 = vpow.pop %v79
  %v81 = vadd.f32 %v71, 0.0
  %v82 = vadd.f32 %v81, %v74
  %v83 = vadd.f32 %v82, %v77
  %v84 = vadd.f32 %v83, %v80
  %v85 = vld [vmem:[%s2] sm:$0xff]
  %87 = vset.pattern.permute.xlu0 0
  %88 = vperm.xlu0 %87, %v85
  %v89 = vpop.permute.xlu0 %88
  %v91 = vmul.f32 %v71, %v89
  %v92 = vadd.f32 %v91, 0.0
  %s93 = scalar_lea.vmem %s2, 8
  %v94 = vld [vmem:[%s93] sm:$0xff]
  %96 = vset.pattern.permute.xlu0 0
  %97 = vperm.xlu0 %96, %v94
  %v98 = vpop.permute.xlu0 %97
  %v100 = vmul.f32 %v74, %v98
  %v101 = vadd.f32 %v92, %v100
  %s102 = scalar_lea.vmem %s2, 16
  %v103 = vld [vmem:[%s102] sm:$0xff]
  %105 = vset.pattern.permute.xlu0 0
  %106 = vperm.xlu0 %105, %v103
  %v107 = vpop.permute.xlu0 %106
  %v109 = vmul.f32 %v77, %v107
  %v110 = vadd.f32 %v101, %v109
  %s111 = scalar_lea.vmem %s2, 24
  %v112 = vld [vmem:[%s111] sm:$0xff]
  %114 = vset.pattern.permute.xlu0 0
  %115 = vperm.xlu0 %114, %v112
  %v116 = vpop.permute.xlu0 %115
  %v118 = vmul.f32 %v80, %v116
  %v119 = vadd.f32 %v110, %v118
  %v120 = vrcp.pop %v84
  %v121 = vmul.f32 %v84, %v120
  %v122 = vsub.f32 1.0, %v121
  %v123 = vmul.f32 %v120, %v122
  %v124 = vadd.f32 %v120, %v123
  %vm125 = vweird.f32 %v84
  %vm126 = vweird.f32 %v120
  %vm127 = vmor %vm125, %vm126
  %v128 = vsel %vm127, %v120, %v124
  %v129 = vand.u32 2147483647, %v84
  %vm130 = vcmp.eq.f32.partialorder %v129, 8.507059e+37
  %v131 = vand.u32 %v84, 2147483648
  %v132 = vor.u32 1.1754944e-38, %v131
  %v133 = vsel %vm130, %v132, %v128
  %v134 = vmul.f32 %v119, %v133
  %v135 = vpack.c.bf16 %v134, %v134
  %v136 = vlaneseq
  %v137 = vand.u32 %v136, 127
  %v138 = vadd.s32 %v137, 128
  %v139 = vadd.s32 %v137, 256
  %v140 = vadd.s32 %v137, 384
  %v141 = vadd.s32 %v137, 512
  %v142 = vadd.s32 %v137, 640
  %v143 = vcvt.s32.f32 %v137
  %v144 = vcvt.s32.f32 %v138
  %v145 = vcvt.s32.f32 %v139
  %v146 = vcvt.s32.f32 %v140
  %v147 = vcvt.s32.f32 %v141
  %v148 = vcvt.s32.f32 %v142
  %v149 = vmul.f32 %v143, 0.0030864198
  %v150 = vmul.f32 %v144, 0.0030864198
  %v151 = vmul.f32 %v145, 0.0030864198
  %v152 = vmul.f32 %v146, 0.0030864198
  %v153 = vmul.f32 %v147, 0.0030864198
  %v154 = vmul.f32 %v148, 0.0030864198
  %v155 = vadd.f32 %v149, 1e-05
  %v156 = vadd.f32 %v150, 1e-05
  %v157 = vadd.f32 %v151, 1e-05
  %v158 = vadd.f32 %v152, 1e-05
  %v159 = vadd.f32 %v153, 1e-05
  %v160 = vadd.f32 %v154, 1e-05
  %v161 = vfloor.f32 %v155
  %v162 = vfloor.f32 %v156
  %v163 = vfloor.f32 %v157
  %v164 = vfloor.f32 %v158
  %v165 = vfloor.f32 %v159
  %v166 = vfloor.f32 %v160
  %v167 = vmul.f32 %v161, 324.0
  %v168 = vmul.f32 %v162, 324.0
  %v169 = vmul.f32 %v163, 324.0
  %v170 = vmul.f32 %v164, 324.0
  %v171 = vmul.f32 %v165, 324.0
  %v172 = vmul.f32 %v166, 324.0
  %v173 = vsub.f32 %v143, %v167
  %v174 = vsub.f32 %v144, %v168
  %v175 = vsub.f32 %v145, %v169
  %v176 = vsub.f32 %v146, %v170
  %v177 = vsub.f32 %v147, %v171
  %v178 = vsub.f32 %v148, %v172
  %v179 = vmul.f32 %v173, 0.055555556
  %v180 = vmul.f32 %v174, 0.055555556
  %v181 = vmul.f32 %v175, 0.055555556
  %v182 = vmul.f32 %v176, 0.055555556
  %v183 = vmul.f32 %v177, 0.055555556
  %v184 = vmul.f32 %v178, 0.055555556
  %v185 = vadd.f32 %v179, 1e-05
  %v186 = vadd.f32 %v180, 1e-05
  %v187 = vadd.f32 %v181, 1e-05
  %v188 = vadd.f32 %v182, 1e-05
  %v189 = vadd.f32 %v183, 1e-05
  %v190 = vadd.f32 %v184, 1e-05
  %v191 = vfloor.f32 %v185
  %v192 = vfloor.f32 %v186
  %v193 = vfloor.f32 %v187
  %v194 = vfloor.f32 %v188
  %v195 = vfloor.f32 %v189
  %v196 = vfloor.f32 %v190
  %v197 = vmul.f32 %v191, 18.0
  %v198 = vmul.f32 %v192, 18.0
  %v199 = vmul.f32 %v193, 18.0
  %v200 = vmul.f32 %v194, 18.0
  %v201 = vmul.f32 %v195, 18.0
  %v202 = vmul.f32 %v196, 18.0
  %v203 = vsub.f32 %v173, %v197
  %v204 = vsub.f32 %v174, %v198
  %v205 = vsub.f32 %v175, %v199
  %v206 = vsub.f32 %v176, %v200
  %v207 = vsub.f32 %v177, %v201
  %v208 = vsub.f32 %v178, %v202
  %vm209 = vcmp.lt.f32.partialorder %v143, 648.0
  %vm210 = vcmp.lt.f32.partialorder %v144, 648.0
  %vm211 = vcmp.lt.f32.partialorder %v145, 648.0
  %vm212 = vcmp.lt.f32.partialorder %v146, 648.0
  %vm213 = vcmp.lt.f32.partialorder %v147, 648.0
  %vm214 = vcmp.lt.f32.partialorder %v148, 648.0
  %vm215 = vcmp.lt.f32.partialorder %v191, 16.0
  %vm216 = vcmp.lt.f32.partialorder %v192, 16.0
  %vm217 = vcmp.lt.f32.partialorder %v193, 16.0
  %vm218 = vcmp.lt.f32.partialorder %v194, 16.0
  %vm219 = vcmp.lt.f32.partialorder %v195, 16.0
  %vm220 = vcmp.lt.f32.partialorder %v196, 16.0
  %vm221 = vmand %vm209, %vm215
  %vm222 = vmand %vm210, %vm216
  %vm223 = vmand %vm211, %vm217
  %vm224 = vmand %vm212, %vm218
  %vm225 = vmand %vm213, %vm219
  %vm226 = vmand %vm214, %vm220
  %vm227 = vcmp.lt.f32.partialorder %v203, 16.0
  %vm228 = vcmp.lt.f32.partialorder %v204, 16.0
  %vm229 = vcmp.lt.f32.partialorder %v205, 16.0
  %vm230 = vcmp.lt.f32.partialorder %v206, 16.0
  %vm231 = vcmp.lt.f32.partialorder %v207, 16.0
  %vm232 = vcmp.lt.f32.partialorder %v208, 16.0
  %vm233 = vmand %vm221, %vm227
  %vm234 = vmand %vm222, %vm228
  %vm235 = vmand %vm223, %vm229
  %vm236 = vmand %vm224, %vm230
  %vm237 = vmand %vm225, %vm231
  %vm238 = vmand %vm226, %vm232
  %v239 = vsel %vm233, 1.0, 0.0
  %v240 = vsel %vm234, 1.0, 0.0
  %v241 = vsel %vm235, 1.0, 0.0
  %v242 = vsel %vm236, 1.0, 0.0
  %v243 = vsel %vm237, 1.0, 0.0
  %v244 = vsel %vm238, 1.0, 0.0
  %v245 = vld [vmem:[%s0 + $0x4] sm:$0xff]
  %v246 = vld [vmem:[%s0 + $0xc] sm:$0xff]
  %v247 = vld [vmem:[%s0 + $0x14] sm:$0xff]
  %251 = vst [vmem:[#allocation1] ss:$2 sm:$0xff] %v245
  %s252 = scalar_lea.vmem [#allocation1], 16
  %253 = vst [vmem:[%s252] ss:$2 sm:$0xff] %v246
  %s254 = scalar_lea.vmem [#allocation1], 32
  %255 = vst [vmem:[%s254] ss:$2 sm:$0xff] %v247
  %v256 = vld.sshfl [vmem:[#allocation1] sm:$0xff pattern:$0x75316420]
  %v257 = vld.sshfl [vmem:[#allocation1 + $0x8] sm:$0xff pattern:$0x75316420]
  %v258 = vld.sshfl [vmem:[#allocation1 + $0x10] sm:$0xff pattern:$0x75316420]
  %v259 = vld.sshfl [vmem:[#allocation1 + $0x18] sm:$0xff pattern:$0x75316420]
  %v260 = vld.sshfl [vmem:[#allocation1 + $0x20] sm:$0xff pattern:$0x75316420]
  %v261 = vld.sshfl [vmem:[#allocation1 + $0x28] sm:$0xff pattern:$0x75316420]
  %v268 = vpack.c.bf16 %v257, %v256
  %v269 = vpack.c.bf16 %v259, %v258
  %v270 = vpack.c.bf16 %v261, %v260
  %271 = vst [vmem:[#allocation3 + $0x30] sm:$0x33] %v268
  %272 = vst [vmem:[#allocation3 + $0x38] sm:$0x33] %v269
  %273 = vst [vmem:[#allocation3 + $0x40] sm:$0x33] %v270
  %v274 = vld [vmem:[%s0] sm:$0xff]
  %v275 = vld [vmem:[%s0 + $0x8] sm:$0xff]
  %v276 = vld [vmem:[%s0 + $0x10] sm:$0xff]
  %v277 = vld [vmem:[%s0 + $0x18] sm:$0xf]
  %282 = vst [vmem:[#allocation1] ss:$2 sm:$0xff] %v274
  %s283 = scalar_lea.vmem [#allocation1], 16
  %284 = vst [vmem:[%s283] ss:$2 sm:$0xff] %v275
  %s285 = scalar_lea.vmem [#allocation1], 32
  %286 = vst [vmem:[%s285] ss:$2 sm:$0xff] %v276
  %s287 = scalar_lea.vmem [#allocation1], 48
  %288 = vst [vmem:[%s287] ss:$2 sm:$0xff] %v277
  %v289 = vld.sshfl [vmem:[#allocation1] sm:$0xff pattern:$0x75316420]
  %v290 = vld.sshfl [vmem:[#allocation1 + $0x8] sm:$0xff pattern:$0x75316420]
  %v291 = vld.sshfl [vmem:[#allocation1 + $0x10] sm:$0xff pattern:$0x75316420]
  %v292 = vld.sshfl [vmem:[#allocation1 + $0x18] sm:$0xff pattern:$0x75316420]
  %v293 = vld.sshfl [vmem:[#allocation1 + $0x20] sm:$0xff pattern:$0x75316420]
  %v294 = vld.sshfl [vmem:[#allocation1 + $0x28] sm:$0xff pattern:$0x75316420]
  %v295 = vld.sshfl [vmem:[#allocation1 + $0x30] sm:$0xff pattern:$0x75316420]
  %v303 = vpack.c.bf16 %v290, %v289
  %v304 = vpack.c.bf16 %v292, %v291
  %v305 = vpack.c.bf16 %v294, %v293
  %v306 = vpack.c.bf16 %v295, %v295
  %311 = vrot.lane.b32.xlu0 %v303, 19
  %v312 = vpop.permute.xlu0 %311
  %313 = vrot.lane.b32.xlu0 %v304, 19
  %v314 = vpop.permute.xlu0 %313
  %315 = vrot.lane.b32.xlu0 %v305, 19
  %v316 = vpop.permute.xlu0 %315
  %317 = vrot.lane.b32.xlu0 %v306, 19
  %v318 = vpop.permute.xlu0 %317
  %v319 = vrot.slane %v312, 4
  %v320 = vrot.slane %v314, 4
  %v321 = vrot.slane %v316, 4
  %v322 = vrot.slane %v318, 4
  %vm323 = vcmask 1043456
  %v324 = vsel %vm323, %v319, %v320
  %vm325 = vcmask 154624
  %v326 = vsel %vm325, %v312, %v324
  %v327 = vsel %vm323, %v320, %v321
  %v328 = vsel %vm325, %v314, %v327
  %v329 = vsel %vm323, %v321, %v322
  %v330 = vsel %vm325, %v316, %v329
  %334 = vst [vmem:[#allocation3] sm:$0x33] %v326
  %335 = vst [vmem:[#allocation3 + $0x8] sm:$0x33] %v328
  %336 = vst [vmem:[#allocation3 + $0x10] sm:$0x33] %v330
  %v337 = vld [vmem:[%s0] sm:$0xff]
  %v338 = vld [vmem:[%s0 + $0x8] sm:$0xff]
  %v339 = vld [vmem:[%s0 + $0x10] sm:$0xff]
  %v340 = vld [vmem:[%s0 + $0x18] sm:$0xf]
  %345 = vst [vmem:[#allocation1] ss:$2 sm:$0xff] %v337
  %s346 = scalar_lea.vmem [#allocation1], 16
  %347 = vst [vmem:[%s346] ss:$2 sm:$0xff] %v338
  %s348 = scalar_lea.vmem [#allocation1], 32
  %349 = vst [vmem:[%s348] ss:$2 sm:$0xff] %v339
  %s350 = scalar_lea.vmem [#allocation1], 48
  %351 = vst [vmem:[%s350] ss:$2 sm:$0xff] %v340
  %v352 = vld.sshfl [vmem:[#allocation1] sm:$0xff pattern:$0x75316420]
  %v353 = vld.sshfl [vmem:[#allocation1 + $0x8] sm:$0xff pattern:$0x75316420]
  %v354 = vld.sshfl [vmem:[#allocation1 + $0x10] sm:$0xff pattern:$0x75316420]
  %v355 = vld.sshfl [vmem:[#allocation1 + $0x18] sm:$0xff pattern:$0x75316420]
  %v356 = vld.sshfl [vmem:[#allocation1 + $0x20] sm:$0xff pattern:$0x75316420]
  %v357 = vld.sshfl [vmem:[#allocation1 + $0x28] sm:$0xff pattern:$0x75316420]
  %v358 = vld.sshfl [vmem:[#allocation1 + $0x30] sm:$0xff pattern:$0x75316420]
  %v366 = vpack.c.bf16 %v353, %v352
  %v367 = vpack.c.bf16 %v355, %v354
  %v368 = vpack.c.bf16 %v357, %v356
  %v369 = vpack.c.bf16 %v358, %v358
  %v374 = vrot.slane %v366, 6
  %v375 = vrot.slane %v367, 6
  %v376 = vrot.slane %v368, 6
  %v377 = vrot.slane %v369, 6
  %378 = vrot.lane.b32.xlu0 %v374, 18
  %v379 = vpop.permute.xlu0 %378
  %380 = vrot.lane.b32.xlu0 %v375, 18
  %v381 = vpop.permute.xlu0 %380
  %382 = vrot.lane.b32.xlu0 %v376, 18
  %v383 = vpop.permute.xlu0 %382
  %384 = vrot.lane.b32.xlu0 %v377, 18
  %v385 = vpop.permute.xlu0 %384
  %v386 = vrot.slane %v379, 4
  %v387 = vrot.slane %v381, 4
  %v388 = vrot.slane %v383, 4
  %v389 = vrot.slane %v385, 4
  %v390 = vsel %vm323, %v386, %v387
  %vm391 = vcmask 146432
  %v392 = vsel %vm391, %v379, %v390
  %v393 = vsel %vm323, %v387, %v388
  %v394 = vsel %vm391, %v381, %v393
  %v395 = vsel %vm323, %v388, %v389
  %v396 = vsel %vm391, %v383, %v395
  %400 = vst [vmem:[#allocation3] sm:$0xcc] %v392
  %401 = vst [vmem:[#allocation3 + $0x8] sm:$0xcc] %v394
  %402 = vst [vmem:[#allocation3 + $0x10] sm:$0xcc] %v396
  %v403 = vld [vmem:[%s0] sm:$0xff]
  %v404 = vld [vmem:[%s0 + $0x8] sm:$0xff]
  %v405 = vld [vmem:[%s0 + $0x10] sm:$0xff]
  %v406 = vld [vmem:[%s0 + $0x18] sm:$0xf]
  %411 = vst [vmem:[#allocation1] ss:$2 sm:$0xff] %v403
  %s412 = scalar_lea.vmem [#allocation1], 16
  %413 = vst [vmem:[%s412] ss:$2 sm:$0xff] %v404
  %s414 = scalar_lea.vmem [#allocation1], 32
  %415 = vst [vmem:[%s414] ss:$2 sm:$0xff] %v405
  %s416 = scalar_lea.vmem [#allocation1], 48
  %417 = vst [vmem:[%s416] ss:$2 sm:$0xff] %v406
  %v418 = vld.sshfl [vmem:[#allocation1] sm:$0xff pattern:$0x75316420]
  %v419 = vld.sshfl [vmem:[#allocation1 + $0x8] sm:$0xff pattern:$0x75316420]
  %v420 = vld.sshfl [vmem:[#allocation1 + $0x10] sm:$0xff pattern:$0x75316420]
  %v421 = vld.sshfl [vmem:[#allocation1 + $0x18] sm:$0xff pattern:$0x75316420]
  %v422 = vld.sshfl [vmem:[#allocation1 + $0x20] sm:$0xff pattern:$0x75316420]
  %v423 = vld.sshfl [vmem:[#allocation1 + $0x28] sm:$0xff pattern:$0x75316420]
  %v424 = vld.sshfl [vmem:[#allocation1 + $0x30] sm:$0xff pattern:$0x75316420]
  %v432 = vpack.c.bf16 %v419, %v418
  %v433 = vpack.c.bf16 %v421, %v420
  %v434 = vpack.c.bf16 %v423, %v422
  %v435 = vpack.c.bf16 %v424, %v424
  %440 = vrot.lane.b32.xlu0 %v432, 17
  %v441 = vpop.permute.xlu0 %440
  %442 = vrot.lane.b32.xlu0 %v433, 17
  %v443 = vpop.permute.xlu0 %442
  %444 = vrot.lane.b32.xlu0 %v434, 17
  %v445 = vpop.permute.xlu0 %444
  %446 = vrot.lane.b32.xlu0 %v435, 17
  %v447 = vpop.permute.xlu0 %446
  %v448 = vrot.slane %v441, 4
  %v449 = vrot.slane %v443, 4
  %v450 = vrot.slane %v445, 4
  %v451 = vrot.slane %v447, 4
  %v452 = vsel %vm323, %v448, %v449
  %vm453 = vcmask 138240
  %v454 = vsel %vm453, %v441, %v452
  %v455 = vsel %vm323, %v449, %v450
  %v456 = vsel %vm453, %v443, %v455
  %v457 = vsel %vm323, %v450, %v451
  %v458 = vsel %vm453, %v445, %v457
  %462 = vst [vmem:[#allocation3 + $0x18] sm:$0x33] %v454
  %463 = vst [vmem:[#allocation3 + $0x20] sm:$0x33] %v456
  %464 = vst [vmem:[#allocation3 + $0x28] sm:$0x33] %v458
  %v465 = vld [vmem:[%s0] sm:$0xff]
  %v466 = vld [vmem:[%s0 + $0x8] sm:$0xff]
  %v467 = vld [vmem:[%s0 + $0x10] sm:$0xff]
  %v468 = vld [vmem:[%s0 + $0x18] sm:$0xf]
  %473 = vst [vmem:[#allocation1] ss:$2 sm:$0xff] %v465
  %s474 = scalar_lea.vmem [#allocation1], 16
  %475 = vst [vmem:[%s474] ss:$2 sm:$0xff] %v466
  %s476 = scalar_lea.vmem [#allocation1], 32
  %477 = vst [vmem:[%s476] ss:$2 sm:$0xff] %v467
  %s478 = scalar_lea.vmem [#allocation1], 48
  %479 = vst [vmem:[%s478] ss:$2 sm:$0xff] %v468
  %v480 = vld.sshfl [vmem:[#allocation1] sm:$0xff pattern:$0x75316420]
  %v481 = vld.sshfl [vmem:[#allocation1 + $0x8] sm:$0xff pattern:$0x75316420]
  %v482 = vld.sshfl [vmem:[#allocation1 + $0x10] sm:$0xff pattern:$0x75316420]
  %v483 = vld.sshfl [vmem:[#allocation1 + $0x18] sm:$0xff pattern:$0x75316420]
  %v484 = vld.sshfl [vmem:[#allocation1 + $0x20] sm:$0xff pattern:$0x75316420]
  %v485 = vld.sshfl [vmem:[#allocation1 + $0x28] sm:$0xff pattern:$0x75316420]
  %v486 = vld.sshfl [vmem:[#allocation1 + $0x30] sm:$0xff pattern:$0x75316420]
  %v494 = vpack.c.bf16 %v481, %v480
  %v495 = vpack.c.bf16 %v483, %v482
  %v496 = vpack.c.bf16 %v485, %v484
  %v497 = vpack.c.bf16 %v486, %v486
  %v502 = vrot.slane %v494, 6
  %v503 = vrot.slane %v495, 6
  %v504 = vrot.slane %v496, 6
  %v505 = vrot.slane %v497, 6
  %506 = vrot.lane.b32.xlu0 %v502, 1
  %v507 = vpop.permute.xlu0 %506
  %508 = vrot.lane.b32.xlu0 %v503, 1
  %v509 = vpop.permute.xlu0 %508
  %510 = vrot.lane.b32.xlu0 %v504, 1
  %v511 = vpop.permute.xlu0 %510
  %512 = vrot.lane.b32.xlu0 %v505, 1
  %v513 = vpop.permute.xlu0 %512
  %v514 = vrot.slane %v507, 4
  %v515 = vrot.slane %v509, 4
  %v516 = vrot.slane %v511, 4
  %v517 = vrot.slane %v513, 4
  %v518 = vsel %vm323, %v514, %v515
  %vm519 = vcmask 7168
  %v520 = vsel %vm519, %v507, %v518
  %v521 = vsel %vm323, %v515, %v516
  %v522 = vsel %vm519, %v509, %v521
  %v523 = vsel %vm323, %v516, %v517
  %v524 = vsel %vm519, %v511, %v523
  %528 = vst [vmem:[#allocation3 + $0x18] sm:$0xcc] %v520
  %529 = vst [vmem:[#allocation3 + $0x20] sm:$0xcc] %v522
  %530 = vst [vmem:[#allocation3 + $0x28] sm:$0xcc] %v524
  %v531 = vld [vmem:[%s0 + $0x4] sm:$0xff]
  %v532 = vld [vmem:[%s0 + $0xc] sm:$0xff]
  %v533 = vld [vmem:[%s0 + $0x14] sm:$0xff]
  %v534 = vld [vmem:[%s0 + $0x1c] sm:$0xf]
  %539 = vst [vmem:[#allocation1] ss:$2 sm:$0xff] %v531
  %s540 = scalar_lea.vmem [#allocation1], 16
  %541 = vst [vmem:[%s540] ss:$2 sm:$0xff] %v532
  %s542 = scalar_lea.vmem [#allocation1], 32
  %543 = vst [vmem:[%s542] ss:$2 sm:$0xff] %v533
  %s544 = scalar_lea.vmem [#allocation1], 48
  %545 = vst [vmem:[%s544] ss:$2 sm:$0xff] %v534
  %v546 = vld.sshfl [vmem:[#allocation1] sm:$0xff pattern:$0x75316420]
  %v547 = vld.sshfl [vmem:[#allocation1 + $0x8] sm:$0xff pattern:$0x75316420]
  %v548 = vld.sshfl [vmem:[#allocation1 + $0x10] sm:$0xff pattern:$0x75316420]
  %v549 = vld.sshfl [vmem:[#allocation1 + $0x18] sm:$0xff pattern:$0x75316420]
  %v550 = vld.sshfl [vmem:[#allocation1 + $0x20] sm:$0xff pattern:$0x75316420]
  %v551 = vld.sshfl [vmem:[#allocation1 + $0x28] sm:$0xff pattern:$0x75316420]
  %v552 = vld.sshfl [vmem:[#allocation1 + $0x30] sm:$0xff pattern:$0x75316420]
  %v560 = vpack.c.bf16 %v547, %v546
  %v561 = vpack.c.bf16 %v549, %v548
  %v562 = vpack.c.bf16 %v551, %v550
  %v563 = vpack.c.bf16 %v552, %v552
  %v568 = vrot.slane %v560, 6
  %v569 = vrot.slane %v561, 6
  %v570 = vrot.slane %v562, 6
  %v571 = vrot.slane %v563, 6
  %572 = vrot.lane.b32.xlu0 %v568, 127
  %v573 = vpop.permute.xlu0 %572
  %574 = vrot.lane.b32.xlu0 %v569, 127
  %v575 = vpop.permute.xlu0 %574
  %576 = vrot.lane.b32.xlu0 %v570, 127
  %v577 = vpop.permute.xlu0 %576
  %578 = vrot.lane.b32.xlu0 %v571, 127
  %v579 = vpop.permute.xlu0 %578
  %v580 = vrot.slane %v573, 4
  %v581 = vrot.slane %v575, 4
  %v582 = vrot.slane %v577, 4
  %v583 = vrot.slane %v579, 4
  %v584 = vsel %vm323, %v580, %v581
  %vm585 = vcmask 1039360
  %v586 = vsel %vm585, %v573, %v584
  %v587 = vsel %vm323, %v581, %v582
  %v588 = vsel %vm585, %v575, %v587
  %v589 = vsel %vm323, %v582, %v583
  %v590 = vsel %vm585, %v577, %v589
  %594 = vst [vmem:[#allocation3 + $0x30] sm:$0xcc] %v586
  %595 = vst [vmem:[#allocation3 + $0x38] sm:$0xcc] %v588
  %596 = vst [vmem:[#allocation3 + $0x40] sm:$0xcc] %v590
  %v597 = vld [vmem:[%s0 + $0x4] sm:$0xff]
  %v598 = vld [vmem:[%s0 + $0xc] sm:$0xff]
  %v599 = vld [vmem:[%s0 + $0x14] sm:$0xff]
  %v600 = vld [vmem:[%s0 + $0x1c] sm:$0xf]
  %605 = vst [vmem:[#allocation1] ss:$2 sm:$0xff] %v597
  %s606 = scalar_lea.vmem [#allocation1], 16
  %607 = vst [vmem:[%s606] ss:$2 sm:$0xff] %v598
  %s608 = scalar_lea.vmem [#allocation1], 32
  %609 = vst [vmem:[%s608] ss:$2 sm:$0xff] %v599
  %s610 = scalar_lea.vmem [#allocation1], 48
  %611 = vst [vmem:[%s610] ss:$2 sm:$0xff] %v600
  %v612 = vld.sshfl [vmem:[#allocation1] sm:$0xff pattern:$0x75316420]
  %v613 = vld.sshfl [vmem:[#allocation1 + $0x8] sm:$0xff pattern:$0x75316420]
  %v614 = vld.sshfl [vmem:[#allocation1 + $0x10] sm:$0xff pattern:$0x75316420]
  %v615 = vld.sshfl [vmem:[#allocation1 + $0x18] sm:$0xff pattern:$0x75316420]
  %v616 = vld.sshfl [vmem:[#allocation1 + $0x20] sm:$0xff pattern:$0x75316420]
  %v617 = vld.sshfl [vmem:[#allocation1 + $0x28] sm:$0xff pattern:$0x75316420]
  %v618 = vld.sshfl [vmem:[#allocation1 + $0x30] sm:$0xff pattern:$0x75316420]
  %v626 = vpack.c.bf16 %v613, %v612
  %v627 = vpack.c.bf16 %v615, %v614
  %v628 = vpack.c.bf16 %v617, %v616
  %v629 = vpack.c.bf16 %v618, %v618
  %634 = vrot.lane.b32.xlu0 %v626, 111
  %v635 = vpop.permute.xlu0 %634
  %636 = vrot.lane.b32.xlu0 %v627, 111
  %v637 = vpop.permute.xlu0 %636
  %638 = vrot.lane.b32.xlu0 %v628, 111
  %v639 = vpop.permute.xlu0 %638
  %640 = vrot.lane.b32.xlu0 %v629, 111
  %v641 = vpop.permute.xlu0 %640
  %v642 = vrot.slane %v635, 4
  %v643 = vrot.slane %v637, 4
  %v644 = vrot.slane %v639, 4
  %v645 = vrot.slane %v641, 4
  %v646 = vsel %vm323, %v642, %v643
  %vm647 = vcmask 908288
  %v648 = vsel %vm647, %v635, %v646
  %v649 = vsel %vm323, %v643, %v644
  %v650 = vsel %vm647, %v637, %v649
  %v651 = vsel %vm323, %v644, %v645
  %v652 = vsel %vm647, %v639, %v651
  %656 = vst [vmem:[#allocation3 + $0x48] sm:$0x33] %v648
  %657 = vst [vmem:[#allocation3 + $0x50] sm:$0x33] %v650
  %658 = vst [vmem:[#allocation3 + $0x58] sm:$0x33] %v652
  %v659 = vld [vmem:[%s0 + $0x4] sm:$0xff]
  %v660 = vld [vmem:[%s0 + $0xc] sm:$0xff]
  %v661 = vld [vmem:[%s0 + $0x14] sm:$0xff]
  %v662 = vld [vmem:[%s0 + $0x1c] sm:$0xf]
  %667 = vst [vmem:[#allocation1] ss:$2 sm:$0xff] %v659
  %s668 = scalar_lea.vmem [#allocation1], 16
  %669 = vst [vmem:[%s668] ss:$2 sm:$0xff] %v660
  %s670 = scalar_lea.vmem [#allocation1], 32
  %671 = vst [vmem:[%s670] ss:$2 sm:$0xff] %v661
  %s672 = scalar_lea.vmem [#allocation1], 48
  %673 = vst [vmem:[%s672] ss:$2 sm:$0xff] %v662
  %v674 = vld.sshfl [vmem:[#allocation1] sm:$0xff pattern:$0x75316420]
  %v675 = vld.sshfl [vmem:[#allocation1 + $0x8] sm:$0xff pattern:$0x75316420]
  %v676 = vld.sshfl [vmem:[#allocation1 + $0x10] sm:$0xff pattern:$0x75316420]
  %v677 = vld.sshfl [vmem:[#allocation1 + $0x18] sm:$0xff pattern:$0x75316420]
  %v678 = vld.sshfl [vmem:[#allocation1 + $0x20] sm:$0xff pattern:$0x75316420]
  %v679 = vld.sshfl [vmem:[#allocation1 + $0x28] sm:$0xff pattern:$0x75316420]
  %v680 = vld.sshfl [vmem:[#allocation1 + $0x30] sm:$0xff pattern:$0x75316420]
  %v688 = vpack.c.bf16 %v675, %v674
  %v689 = vpack.c.bf16 %v677, %v676
  %v690 = vpack.c.bf16 %v679, %v678
  %v691 = vpack.c.bf16 %v680, %v680
  %v696 = vrot.slane %v688, 6
  %v697 = vrot.slane %v689, 6
  %v698 = vrot.slane %v690, 6
  %v699 = vrot.slane %v691, 6
  %700 = vrot.lane.b32.xlu0 %v696, 110
  %v701 = vpop.permute.xlu0 %700
  %702 = vrot.lane.b32.xlu0 %v697, 110
  %v703 = vpop.permute.xlu0 %702
  %704 = vrot.lane.b32.xlu0 %v698, 110
  %v705 = vpop.permute.xlu0 %704
  %706 = vrot.lane.b32.xlu0 %v699, 110
  %v707 = vpop.permute.xlu0 %706
  %v708 = vrot.slane %v701, 4
  %v709 = vrot.slane %v703, 4
  %v710 = vrot.slane %v705, 4
  %v711 = vrot.slane %v707, 4
  %v712 = vsel %vm323, %v708, %v709
  %vm713 = vcmask 900096
  %v714 = vsel %vm713, %v701, %v712
  %v715 = vsel %vm323, %v709, %v710
  %v716 = vsel %vm713, %v703, %v715
  %v717 = vsel %vm323, %v710, %v711
  %v718 = vsel %vm713, %v705, %v717
  %722 = vst [vmem:[#allocation3 + $0x48] sm:$0xcc] %v714
  %723 = vst [vmem:[#allocation3 + $0x50] sm:$0xcc] %v716
  %724 = vst [vmem:[#allocation3 + $0x58] sm:$0xcc] %v718
  %v725 = vld [vmem:[%s0 + $0x4] sm:$0xff]
  %v726 = vld [vmem:[%s0 + $0xc] sm:$0xff]
  %v727 = vld [vmem:[%s0 + $0x14] sm:$0xff]
  %v728 = vld [vmem:[%s0 + $0x1c] sm:$0xf]
  %733 = vst [vmem:[#allocation1] ss:$2 sm:$0xff] %v725
  %s734 = scalar_lea.vmem [#allocation1], 16
  %735 = vst [vmem:[%s734] ss:$2 sm:$0xff] %v726
  %s736 = scalar_lea.vmem [#allocation1], 32
  %737 = vst [vmem:[%s736] ss:$2 sm:$0xff] %v727
  %s738 = scalar_lea.vmem [#allocation1], 48
  %739 = vst [vmem:[%s738] ss:$2 sm:$0xff] %v728
  %v740 = vld.sshfl [vmem:[#allocation1] sm:$0xff pattern:$0x75316420]
  %v741 = vld.sshfl [vmem:[#allocation1 + $0x8] sm:$0xff pattern:$0x75316420]
  %v742 = vld.sshfl [vmem:[#allocation1 + $0x10] sm:$0xff pattern:$0x75316420]
  %v743 = vld.sshfl [vmem:[#allocation1 + $0x18] sm:$0xff pattern:$0x75316420]
  %v744 = vld.sshfl [vmem:[#allocation1 + $0x20] sm:$0xff pattern:$0x75316420]
  %v745 = vld.sshfl [vmem:[#allocation1 + $0x28] sm:$0xff pattern:$0x75316420]
  %v746 = vld.sshfl [vmem:[#allocation1 + $0x30] sm:$0xff pattern:$0x75316420]
  %v754 = vpack.c.bf16 %v741, %v740
  %v755 = vpack.c.bf16 %v743, %v742
  %v756 = vpack.c.bf16 %v745, %v744
  %v757 = vpack.c.bf16 %v746, %v746
  %762 = vrot.lane.b32.xlu0 %v754, 109
  %v763 = vpop.permute.xlu0 %762
  %764 = vrot.lane.b32.xlu0 %v755, 109
  %v765 = vpop.permute.xlu0 %764
  %766 = vrot.lane.b32.xlu0 %v756, 109
  %v767 = vpop.permute.xlu0 %766
  %768 = vrot.lane.b32.xlu0 %v757, 109
  %v769 = vpop.permute.xlu0 %768
  %v770 = vrot.slane %v763, 4
  %v771 = vrot.slane %v765, 4
  %v772 = vrot.slane %v767, 4
  %v773 = vrot.slane %v769, 4
  %v774 = vsel %vm323, %v770, %v771
  %vm775 = vcmask 891904
  %v776 = vsel %vm775, %v763, %v774
  %v777 = vsel %vm323, %v771, %v772
  %v778 = vsel %vm775, %v765, %v777
  %v779 = vsel %vm323, %v772, %v773
  %v780 = vsel %vm775, %v767, %v779
  %784 = vst [vmem:[#allocation3 + $0x60] sm:$0x33] %v776
  %785 = vst [vmem:[#allocation3 + $0x68] sm:$0x33] %v778
  %786 = vst [vmem:[#allocation3 + $0x70] sm:$0x33] %v780
  %v787 = vld [vmem:[#allocation3] sm:$0xff]
  %v788 = vld [vmem:[#allocation3 + $0x8] sm:$0xff]
  %v789 = vld [vmem:[#allocation3 + $0x10] sm:$0xff]
  %v790 = vld [vmem:[#allocation3 + $0x18] sm:$0xff]
  %v791 = vld [vmem:[#allocation3 + $0x20] sm:$0xff]
  %v792 = vld [vmem:[#allocation3 + $0x28] sm:$0xff]
  %v793 = vld [vmem:[#allocation3 + $0x30] sm:$0xff]
  %v794 = vld [vmem:[#allocation3 + $0x38] sm:$0xff]
  %v795 = vld [vmem:[#allocation3 + $0x40] sm:$0xff]
  %v796 = vld [vmem:[#allocation3 + $0x48] sm:$0xff]
  %v797 = vld [vmem:[#allocation3 + $0x50] sm:$0xff]
  %v798 = vld [vmem:[#allocation3 + $0x58] sm:$0xff]
  %v799 = vld [vmem:[#allocation3 + $0x60] sm:$0x33]
  %v800 = vld [vmem:[#allocation3 + $0x68] sm:$0x33]
  %v801 = vld [vmem:[#allocation3 + $0x70] sm:$0x33]
  %v817 = vunpack.c.l.b16 %v787
  %v818 = vunpack.c.h.b16 %v787
  %v819 = vunpack.c.l.b16 %v788
  %v820 = vunpack.c.h.b16 %v788
  %v821 = vunpack.c.l.b16 %v789
  %v822 = vunpack.c.h.b16 %v789
  %v823 = vunpack.c.l.b16 %v790
  %v824 = vunpack.c.h.b16 %v790
  %v825 = vunpack.c.l.b16 %v791
  %v826 = vunpack.c.h.b16 %v791
  %v827 = vunpack.c.l.b16 %v792
  %v828 = vunpack.c.h.b16 %v792
  %v829 = vunpack.c.l.b16 %v793
  %v830 = vunpack.c.h.b16 %v793
  %v831 = vunpack.c.l.b16 %v794
  %v832 = vunpack.c.h.b16 %v794
  %v833 = vunpack.c.l.b16 %v795
  %v834 = vunpack.c.h.b16 %v795
  %v835 = vunpack.c.l.b16 %v796
  %v836 = vunpack.c.h.b16 %v796
  %v837 = vunpack.c.l.b16 %v797
  %v838 = vunpack.c.h.b16 %v797
  %v839 = vunpack.c.l.b16 %v798
  %v840 = vunpack.c.h.b16 %v798
  %v841 = vunpack.c.l.b16 %v799
  %v842 = vunpack.c.h.b16 %v799
  %v843 = vunpack.c.l.b16 %v800
  %v844 = vunpack.c.h.b16 %v800
  %v845 = vunpack.c.l.b16 %v801
  %v846 = vunpack.c.h.b16 %v801
  %v847 = vpack.c.b16 %v823, %v817
  %v848 = vpack.c.b16 %v824, %v818
  %v849 = vpack.c.b16 %v825, %v819
  %v850 = vpack.c.b16 %v826, %v820
  %v851 = vpack.c.b16 %v827, %v821
  %v852 = vpack.c.b16 %v828, %v822
  %v853 = vpack.c.b16 %v835, %v829
  %v854 = vpack.c.b16 %v836, %v830
  %v855 = vpack.c.b16 %v837, %v831
  %v856 = vpack.c.b16 %v838, %v832
  %v857 = vpack.c.b16 %v839, %v833
  %v858 = vpack.c.b16 %v840, %v834
  %v859 = vpack.c.b16 %v841, %v841
  %v860 = vpack.c.b16 %v842, %v842
  %v861 = vpack.c.b16 %v843, %v843
  %v862 = vpack.c.b16 %v844, %v844
  %v863 = vpack.c.b16 %v845, %v845
  %v864 = vpack.c.b16 %v846, %v846
  %vm877 = vcmask 293888
  %v879 = vsel %vm877, %v135, 0
  %vm881 = vcmask 1041408
  %v883 = vsel %vm881, %v859, 0
  %v886 = vsel %vm881, %v860, 0
  %v889 = vsel %vm881, %v861, 0
  %v892 = vsel %vm881, %v862, 0
  %v895 = vsel %vm881, %v863, 0
  %v898 = vsel %vm881, %v864, 0
  %900 = vmatpush.bf16.msra.mxu0 0
  %901 = vmatpush.bf16.msra.mxu0 0
  %902 = vmatpush.bf16.msra.mxu0 0
  %903 = vmatpush.bf16.msra.mxu0 0
  %904 = vmatpush.bf16.msra.mxu0 0
  %905 = vmatpush.bf16.msra.mxu0 %v883
  %906 = vmatpush.bf16.msra.mxu0 %v853
  %907 = vmatpush.bf16.msra.mxu0 %v847
  %908 = vmatmul.bf16.gmra.mxu0 %v879
  %v909 = vpop.f32.mrf.mxu0
  %v910 = vadd.f32 0.0, %v909
  %v911 = vpop.f32.mrf.mxu0
  %912 = vdwg.mxu0
  %913 = vmatpush.bf16.msra.mxu0 0
  %914 = vmatpush.bf16.msra.mxu0 0
  %915 = vmatpush.bf16.msra.mxu0 0
  %916 = vmatpush.bf16.msra.mxu0 0
  %917 = vmatpush.bf16.msra.mxu0 0
  %918 = vmatpush.bf16.msra.mxu0 %v886
  %919 = vmatpush.bf16.msra.mxu0 %v854
  %920 = vmatpush.bf16.msra.mxu0 %v848
  %921 = vmatmul.bf16.gmra.mxu0 %v879
  %v922 = vpop.f32.mrf.mxu0
  %v923 = vadd.f32 0.0, %v922
  %v924 = vpop.f32.mrf.mxu0
  %925 = vdwg.mxu0
  %926 = vmatpush.bf16.msra.mxu0 0
  %927 = vmatpush.bf16.msra.mxu0 0
  %928 = vmatpush.bf16.msra.mxu0 0
  %929 = vmatpush.bf16.msra.mxu0 0
  %930 = vmatpush.bf16.msra.mxu0 0
  %931 = vmatpush.bf16.msra.mxu0 %v889
  %932 = vmatpush.bf16.msra.mxu0 %v855
  %933 = vmatpush.bf16.msra.mxu0 %v849
  %934 = vmatmul.bf16.gmra.mxu0 %v879
  %v935 = vpop.f32.mrf.mxu0
  %v936 = vadd.f32 0.0, %v935
  %v937 = vpop.f32.mrf.mxu0
  %938 = vdwg.mxu0
  %939 = vmatpush.bf16.msra.mxu0 0
  %940 = vmatpush.bf16.msra.mxu0 0
  %941 = vmatpush.bf16.msra.mxu0 0
  %942 = vmatpush.bf16.msra.mxu0 0
  %943 = vmatpush.bf16.msra.mxu0 0
  %944 = vmatpush.bf16.msra.mxu0 %v892
  %945 = vmatpush.bf16.msra.mxu0 %v856
  %946 = vmatpush.bf16.msra.mxu0 %v850
  %947 = vmatmul.bf16.gmra.mxu0 %v879
  %v948 = vpop.f32.mrf.mxu0
  %v949 = vadd.f32 0.0, %v948
  %v950 = vpop.f32.mrf.mxu0
  %951 = vdwg.mxu0
  %952 = vmatpush.bf16.msra.mxu0 0
  %953 = vmatpush.bf16.msra.mxu0 0
  %954 = vmatpush.bf16.msra.mxu0 0
  %955 = vmatpush.bf16.msra.mxu0 0
  %956 = vmatpush.bf16.msra.mxu0 0
  %957 = vmatpush.bf16.msra.mxu0 %v895
  %958 = vmatpush.bf16.msra.mxu0 %v857
  %959 = vmatpush.bf16.msra.mxu0 %v851
  %960 = vmatmul.bf16.gmra.mxu0 %v879
  %v961 = vpop.f32.mrf.mxu0
  %v962 = vadd.f32 0.0, %v961
  %v963 = vpop.f32.mrf.mxu0
  %964 = vdwg.mxu0
  %965 = vmatpush.bf16.msra.mxu0 0
  %966 = vmatpush.bf16.msra.mxu0 0
  %967 = vmatpush.bf16.msra.mxu0 0
  %968 = vmatpush.bf16.msra.mxu0 0
  %969 = vmatpush.bf16.msra.mxu0 0
  %970 = vmatpush.bf16.msra.mxu0 %v898
  %971 = vmatpush.bf16.msra.mxu0 %v858
  %972 = vmatpush.bf16.msra.mxu0 %v852
  %973 = vmatmul.bf16.gmra.mxu0 %v879
  %v974 = vpop.f32.mrf.mxu0
  %v975 = vadd.f32 0.0, %v974
  %v976 = vpop.f32.mrf.mxu0
  %977 = vdwg.mxu0
  %v978 = vmul.f32 %v910, %v239
  %v979 = vmul.f32 %v923, %v240
  %v980 = vmul.f32 %v936, %v241
  %v981 = vmul.f32 %v949, %v242
  %v982 = vmul.f32 %v962, %v243
  %v983 = vmul.f32 %v975, %v244
  %vm984 = vcmask 1043456
  %v985 = vsel %vm984, %v978, 0.0
  %v986 = vsel %vm984, %v979, 0.0
  %v987 = vadd.f32 %v985, %v986
  %v988 = vsel %vm984, %v980, 0.0
  %v989 = vadd.f32 %v987, %v988
  %v990 = vsel %vm984, %v981, 0.0
  %v991 = vadd.f32 %v989, %v990
  %v992 = vsel %vm984, %v982, 0.0
  %v993 = vadd.f32 %v991, %v992
  %v994 = vsel %vm984, %v983, 0.0
  %v995 = vadd.f32 %v993, %v994
  %996 = vadd.xlane.f32.xlu0 %v995
  %v997 = vpop.xlane.xlu0 %996
  %v998 = vmul.f32 %v997, 0.001953125
  %v999 = vsub.f32 %v910, %v998
  %v1000 = vsub.f32 %v923, %v998
  %v1001 = vsub.f32 %v936, %v998
  %v1002 = vsub.f32 %v949, %v998
  %v1003 = vsub.f32 %v962, %v998
  %v1004 = vsub.f32 %v975, %v998
  %v1005 = vmul.f32 %v999, %v239
  %v1006 = vmul.f32 %v1000, %v240
  %v1007 = vmul.f32 %v1001, %v241
  %v1008 = vmul.f32 %v1002, %v242
  %v1009 = vmul.f32 %v1003, %v243
  %v1010 = vmul.f32 %v1004, %v244
  %v1011 = vmul.f32 %v1005, %v1005
  %v1012 = vmul.f32 %v1006, %v1006
  %v1013 = vmul.f32 %v1007, %v1007
  %v1014 = vmul.f32 %v1008, %v1008
  %v1015 = vmul.f32 %v1009, %v1009
  %v1016 = vmul.f32 %v1010, %v1010
  %v1017 = vsel %vm984, %v1011, 0.0
  %v1018 = vsel %vm984, %v1012, 0.0
  %v1019 = vadd.f32 %v1017, %v1018
  %v1020 = vsel %vm984, %v1013, 0.0
  %v1021 = vadd.f32 %v1019, %v1020
  %v1022 = vsel %vm984, %v1014, 0.0
  %v1023 = vadd.f32 %v1021, %v1022
  %v1024 = vsel %vm984, %v1015, 0.0
  %v1025 = vadd.f32 %v1023, %v1024
  %v1026 = vsel %vm984, %v1016, 0.0
  %v1027 = vadd.f32 %v1025, %v1026
  %1028 = vadd.xlane.f32.xlu0 %v1027
  %v1029 = vpop.xlane.xlu0 %1028
  %v1030 = vmul.f32 %v1029, 0.001953125
  %v1031 = vadd.f32 %v1030, 1e-05
  %v1032 = vrsqrt.pop %v1031
  %v1033 = vmul.f32 %v1032, %v1031
  %v1034 = vmul.f32 %v1033, %v1032
  %v1035 = vmul.f32 0.5, %v1034
  %v1036 = vsub.f32 1.5, %v1035
  %v1037 = vmul.f32 %v1032, %v1036
  %vm1038 = vweird.f32 %v1031
  %vm1039 = vweird.f32 %v1032
  %vm1040 = vmor %vm1038, %vm1039
  %v1041 = vsel %vm1040, %v1032, %v1037
  %v1042 = vld [vmem:[%s3] sm:$0xf]
  %v1043 = vmul.f32 %v1041, %v1042
  %v1044 = vld [vmem:[%s4] sm:$0xf]
  %v1045 = vmul.f32 %v998, %v1043
  %v1046 = vsub.f32 %v1044, %v1045
  %1048 = vset.pattern.permute.xlu0 0
  %1049 = vperm.xlu0 %1048, %v1043
  %v1050 = vpop.permute.xlu0 %1049
  %v1052 = vmul.f32 %v910, %v1050
  %v1053 = vmul.f32 %v923, %v1050
  %v1054 = vmul.f32 %v936, %v1050
  %v1055 = vmul.f32 %v949, %v1050
  %v1056 = vmul.f32 %v962, %v1050
  %v1057 = vmul.f32 %v975, %v1050
  %1059 = vset.pattern.permute.xlu0 0
  %1060 = vperm.xlu0 %1059, %v1046
  %v1061 = vpop.permute.xlu0 %1060
  %v1063 = vadd.f32 %v1052, %v1061
  %v1064 = vadd.f32 %v1053, %v1061
  %v1065 = vadd.f32 %v1054, %v1061
  %v1066 = vadd.f32 %v1055, %v1061
  %v1067 = vadd.f32 %v1056, %v1061
  %v1068 = vadd.f32 %v1057, %v1061
  %v1069 = vmax.f32 %v1063, 0.0
  %v1070 = vmax.f32 %v1064, 0.0
  %v1071 = vmax.f32 %v1065, 0.0
  %v1072 = vmax.f32 %v1066, 0.0
  %v1073 = vmax.f32 %v1067, 0.0
  %v1074 = vmax.f32 %v1068, 0.0
  %v1075 = vmul.f32 %v1069, %v239
  %v1076 = vmul.f32 %v1070, %v240
  %v1077 = vmul.f32 %v1071, %v241
  %v1078 = vmul.f32 %v1072, %v242
  %v1079 = vmul.f32 %v1073, %v243
  %v1080 = vmul.f32 %v1074, %v244
  %1081 = vst [vmem:[#allocation2] sm:$0x3] 0
  %1082 = vst [vmem:[#allocation2 + $0xe] sm:$0x3] 0
  %v1083 = vpack.c.bf16 %v1076, %v1075
  %v1084 = vpack.c.bf16 %v1078, %v1077
  %v1085 = vpack.c.bf16 %v1080, %v1079
  %v1089 = vrot.slane %v1083, 2
  %v1090 = vrot.slane %v1084, 4
  %v1091 = vrot.slane %v1084, 6
  %v1092 = vrot.slane %v1085, 2
  %v1095 = vsel %vm881, %v1083, %v1089
  %vm1096 = vcmask 1045508
  %v1099 = vsel %vm1096, %v1090, %v1091
  %v1100 = vsel %vm984, %v1095, %v1099
  %v1103 = vsel %vm881, %v1085, %v1092
  %1106 = vst [vmem:[#allocation2 + $0x2] sm:$0xff] %v1100
  %1107 = vst [vmem:[#allocation2 + $0xa] sm:$0xf] %v1103
  %v1108 = vld [vmem:[#allocation2] sm:$0xff]
  %v1109 = vld [vmem:[#allocation2 + $0x8] sm:$0x3f]
  %1111 = vst [vmem:[#allocation1] ss:$2 sm:$0xff] %v1108
  %s1113 = scalar_lea.vmem [#allocation1], 16
  %1114 = vst [vmem:[%s1113] ss:$2 sm:$0xff] %v1109
  %v1115 = vld.sshfl [vmem:[#allocation1] sm:$0xff pattern:$0x75643120]
  %v1117 = vld.sshfl [vmem:[#allocation1 + $0x8] sm:$0xff pattern:$0x75643120]
  %v1119 = vld.sshfl [vmem:[#allocation1 + $0x10] sm:$0xff pattern:$0x75643120]
  %v1121 = vld.sshfl [vmem:[#allocation1 + $0x18] sm:$0xff pattern:$0x75643120]
  %1123 = vrot.lane.b32.xlu0 %v1115, 19
  %v1124 = vpop.permute.xlu0 %1123
  %1125 = vrot.lane.b32.xlu0 %v1117, 19
  %v1126 = vpop.permute.xlu0 %1125
  %1127 = vrot.lane.b32.xlu0 %v1119, 19
  %v1128 = vpop.permute.xlu0 %1127
  %1129 = vrot.lane.b32.xlu0 %v1121, 19
  %v1130 = vpop.permute.xlu0 %1129
  %v1131 = vrot.slane %v1124, 4
  %v1132 = vrot.slane %v1126, 4
  %v1133 = vrot.slane %v1128, 4
  %v1134 = vrot.slane %v1130, 4
  %v1135 = vsel %vm323, %v1131, %v1132
  %v1136 = vsel %vm325, %v1124, %v1135
  %v1137 = vsel %vm323, %v1132, %v1133
  %v1138 = vsel %vm325, %v1126, %v1137
  %v1139 = vsel %vm323, %v1133, %v1134
  %v1140 = vsel %vm325, %v1128, %v1139
  %1144 = vst [vmem:[#allocation3] sm:$0x33] %v1136
  %1145 = vst [vmem:[#allocation3 + $0x8] sm:$0x33] %v1138
  %1146 = vst [vmem:[#allocation3 + $0x10] sm:$0x33] %v1140
  %v1147 = vld [vmem:[#allocation2] sm:$0xff]
  %v1148 = vld [vmem:[#allocation2 + $0x8] sm:$0x3f]
  %s1150 = scalar_lea.vmem [#allocation1], 1
  %1151 = vst [vmem:[%s1150] ss:$2 sm:$0xff] %v1147
  %s1153 = scalar_lea.vmem [#allocation1], 17
  %1154 = vst [vmem:[%s1153] ss:$2 sm:$0xff] %v1148
  %v1155 = vld.sshfl [vmem:[#allocation1] sm:$0xff pattern:$0x75643120]
  %v1157 = vld.sshfl [vmem:[#allocation1 + $0x8] sm:$0xff pattern:$0x75643120]
  %v1159 = vld.sshfl [vmem:[#allocation1 + $0x10] sm:$0xff pattern:$0x75643120]
  %v1161 = vld.sshfl [vmem:[#allocation1 + $0x18] sm:$0xff pattern:$0x75643120]
  %1163 = vrot.lane.b32.xlu0 %v1155, 18
  %v1164 = vpop.permute.xlu0 %1163
  %1165 = vrot.lane.b32.xlu0 %v1157, 18
  %v1166 = vpop.permute.xlu0 %1165
  %1167 = vrot.lane.b32.xlu0 %v1159, 18
  %v1168 = vpop.permute.xlu0 %1167
  %1169 = vrot.lane.b32.xlu0 %v1161, 18
  %v1170 = vpop.permute.xlu0 %1169
  %v1171 = vrot.slane %v1164, 4
  %v1172 = vrot.slane %v1166, 4
  %v1173 = vrot.slane %v1168, 4
  %v1174 = vrot.slane %v1170, 4
  %v1175 = vsel %vm323, %v1171, %v1172
  %v1176 = vsel %vm391, %v1164, %v1175
  %v1177 = vsel %vm323, %v1172, %v1173
  %v1178 = vsel %vm391, %v1166, %v1177
  %v1179 = vsel %vm323, %v1173, %v1174
  %v1180 = vsel %vm391, %v1168, %v1179
  %1184 = vst [vmem:[#allocation3] sm:$0xcc] %v1176
  %1185 = vst [vmem:[#allocation3 + $0x8] sm:$0xcc] %v1178
  %1186 = vst [vmem:[#allocation3 + $0x10] sm:$0xcc] %v1180
  %v1187 = vld [vmem:[#allocation2] sm:$0xff]
  %v1188 = vld [vmem:[#allocation2 + $0x8] sm:$0x3f]
  %1190 = vst [vmem:[#allocation1] ss:$2 sm:$0xff] %v1187
  %s1192 = scalar_lea.vmem [#allocation1], 16
  %1193 = vst [vmem:[%s1192] ss:$2 sm:$0xff] %v1188
  %v1194 = vld.sshfl [vmem:[#allocation1] sm:$0xff pattern:$0x75643120]
  %v1196 = vld.sshfl [vmem:[#allocation1 + $0x8] sm:$0xff pattern:$0x75643120]
  %v1198 = vld.sshfl [vmem:[#allocation1 + $0x10] sm:$0xff pattern:$0x75643120]
  %v1200 = vld.sshfl [vmem:[#allocation1 + $0x18] sm:$0xff pattern:$0x75643120]
  %1202 = vrot.lane.b32.xlu0 %v1194, 17
  %v1203 = vpop.permute.xlu0 %1202
  %1204 = vrot.lane.b32.xlu0 %v1196, 17
  %v1205 = vpop.permute.xlu0 %1204
  %1206 = vrot.lane.b32.xlu0 %v1198, 17
  %v1207 = vpop.permute.xlu0 %1206
  %1208 = vrot.lane.b32.xlu0 %v1200, 17
  %v1209 = vpop.permute.xlu0 %1208
  %v1210 = vrot.slane %v1203, 4
  %v1211 = vrot.slane %v1205, 4
  %v1212 = vrot.slane %v1207, 4
  %v1213 = vrot.slane %v1209, 4
  %v1214 = vsel %vm323, %v1210, %v1211
  %v1215 = vsel %vm453, %v1203, %v1214
  %v1216 = vsel %vm323, %v1211, %v1212
  %v1217 = vsel %vm453, %v1205, %v1216
  %v1218 = vsel %vm323, %v1212, %v1213
  %v1219 = vsel %vm453, %v1207, %v1218
  %1223 = vst [vmem:[#allocation3 + $0x18] sm:$0x33] %v1215
  %1224 = vst [vmem:[#allocation3 + $0x20] sm:$0x33] %v1217
  %1225 = vst [vmem:[#allocation3 + $0x28] sm:$0x33] %v1219
  %v1226 = vld [vmem:[#allocation2] sm:$0xff]
  %v1227 = vld [vmem:[#allocation2 + $0x8] sm:$0x3f]
  %s1229 = scalar_lea.vmem [#allocation1], 1
  %1230 = vst [vmem:[%s1229] ss:$2 sm:$0xff] %v1226
  %s1232 = scalar_lea.vmem [#allocation1], 17
  %1233 = vst [vmem:[%s1232] ss:$2 sm:$0xff] %v1227
  %v1234 = vld.sshfl [vmem:[#allocation1] sm:$0xff pattern:$0x75643120]
  %v1236 = vld.sshfl [vmem:[#allocation1 + $0x8] sm:$0xff pattern:$0x75643120]
  %v1238 = vld.sshfl [vmem:[#allocation1 + $0x10] sm:$0xff pattern:$0x75643120]
  %v1240 = vld.sshfl [vmem:[#allocation1 + $0x18] sm:$0xff pattern:$0x75643120]
  %1242 = vrot.lane.b32.xlu0 %v1234, 1
  %v1243 = vpop.permute.xlu0 %1242
  %1244 = vrot.lane.b32.xlu0 %v1236, 1
  %v1245 = vpop.permute.xlu0 %1244
  %1246 = vrot.lane.b32.xlu0 %v1238, 1
  %v1247 = vpop.permute.xlu0 %1246
  %1248 = vrot.lane.b32.xlu0 %v1240, 1
  %v1249 = vpop.permute.xlu0 %1248
  %v1250 = vrot.slane %v1243, 4
  %v1251 = vrot.slane %v1245, 4
  %v1252 = vrot.slane %v1247, 4
  %v1253 = vrot.slane %v1249, 4
  %v1254 = vsel %vm323, %v1250, %v1251
  %v1255 = vsel %vm519, %v1243, %v1254
  %v1256 = vsel %vm323, %v1251, %v1252
  %v1257 = vsel %vm519, %v1245, %v1256
  %v1258 = vsel %vm323, %v1252, %v1253
  %v1259 = vsel %vm519, %v1247, %v1258
  %1263 = vst [vmem:[#allocation3 + $0x18] sm:$0xcc] %v1255
  %1264 = vst [vmem:[#allocation3 + $0x20] sm:$0xcc] %v1257
  %1265 = vst [vmem:[#allocation3 + $0x28] sm:$0xcc] %v1259
  %v1266 = vld [vmem:[#allocation2 + $0x2] sm:$0xff]
  %v1267 = vld [vmem:[#allocation2 + $0xa] sm:$0xf]
  %1269 = vst [vmem:[#allocation1] ss:$2 sm:$0xff] %v1266
  %s1271 = scalar_lea.vmem [#allocation1], 16
  %1272 = vst [vmem:[%s1271] ss:$2 sm:$0xff] %v1267
  %v1273 = vld.sshfl [vmem:[#allocation1] sm:$0xff pattern:$0x75643120]
  %v1274 = vld.sshfl [vmem:[#allocation1 + $0x8] sm:$0xff pattern:$0x75643120]
  %v1275 = vld.sshfl [vmem:[#allocation1 + $0x10] sm:$0xff pattern:$0x75643120]
  %1279 = vst [vmem:[#allocation3 + $0x30] sm:$0x33] %v1273
  %1280 = vst [vmem:[#allocation3 + $0x38] sm:$0x33] %v1274
  %1281 = vst [vmem:[#allocation3 + $0x40] sm:$0x33] %v1275
  %v1282 = vld [vmem:[#allocation2 + $0x2] sm:$0xff]
  %v1283 = vld [vmem:[#allocation2 + $0xa] sm:$0x3f]
  %s1285 = scalar_lea.vmem [#allocation1], 1
  %1286 = vst [vmem:[%s1285] ss:$2 sm:$0xff] %v1282
  %s1288 = scalar_lea.vmem [#allocation1], 17
  %1289 = vst [vmem:[%s1288] ss:$2 sm:$0xff] %v1283
  %v1290 = vld.sshfl [vmem:[#allocation1] sm:$0xff pattern:$0x75643120]
  %v1292 = vld.sshfl [vmem:[#allocation1 + $0x8] sm:$0xff pattern:$0x75643120]
  %v1294 = vld.sshfl [vmem:[#allocation1 + $0x10] sm:$0xff pattern:$0x75643120]
  %v1296 = vld.sshfl [vmem:[#allocation1 + $0x18] sm:$0xff pattern:$0x75643120]
  %1298 = vrot.lane.b32.xlu0 %v1290, 127
  %v1299 = vpop.permute.xlu0 %1298
  %1300 = vrot.lane.b32.xlu0 %v1292, 127
  %v1301 = vpop.permute.xlu0 %1300
  %1302 = vrot.lane.b32.xlu0 %v1294, 127
  %v1303 = vpop.permute.xlu0 %1302
  %1304 = vrot.lane.b32.xlu0 %v1296, 127
  %v1305 = vpop.permute.xlu0 %1304
  %v1306 = vrot.slane %v1299, 4
  %v1307 = vrot.slane %v1301, 4
  %v1308 = vrot.slane %v1303, 4
  %v1309 = vrot.slane %v1305, 4
  %v1310 = vsel %vm323, %v1306, %v1307
  %v1311 = vsel %vm585, %v1299, %v1310
  %v1312 = vsel %vm323, %v1307, %v1308
  %v1313 = vsel %vm585, %v1301, %v1312
  %v1314 = vsel %vm323, %v1308, %v1309
  %v1315 = vsel %vm585, %v1303, %v1314
  %1319 = vst [vmem:[#allocation3 + $0x30] sm:$0xcc] %v1311
  %1320 = vst [vmem:[#allocation3 + $0x38] sm:$0xcc] %v1313
  %1321 = vst [vmem:[#allocation3 + $0x40] sm:$0xcc] %v1315
  %v1322 = vld [vmem:[#allocation2 + $0x2] sm:$0xff]
  %v1323 = vld [vmem:[#allocation2 + $0xa] sm:$0x3f]
  %1325 = vst [vmem:[#allocation1] ss:$2 sm:$0xff] %v1322
  %s1327 = scalar_lea.vmem [#allocation1], 16
  %1328 = vst [vmem:[%s1327] ss:$2 sm:$0xff] %v1323
  %v1329 = vld.sshfl [vmem:[#allocation1] sm:$0xff pattern:$0x75643120]
  %v1331 = vld.sshfl [vmem:[#allocation1 + $0x8] sm:$0xff pattern:$0x75643120]
  %v1333 = vld.sshfl [vmem:[#allocation1 + $0x10] sm:$0xff pattern:$0x75643120]
  %v1335 = vld.sshfl [vmem:[#allocation1 + $0x18] sm:$0xff pattern:$0x75643120]
  %1337 = vrot.lane.b32.xlu0 %v1329, 111
  %v1338 = vpop.permute.xlu0 %1337
  %1339 = vrot.lane.b32.xlu0 %v1331, 111
  %v1340 = vpop.permute.xlu0 %1339
  %1341 = vrot.lane.b32.xlu0 %v1333, 111
  %v1342 = vpop.permute.xlu0 %1341
  %1343 = vrot.lane.b32.xlu0 %v1335, 111
  %v1344 = vpop.permute.xlu0 %1343
  %v1345 = vrot.slane %v1338, 4
  %v1346 = vrot.slane %v1340, 4
  %v1347 = vrot.slane %v1342, 4
  %v1348 = vrot.slane %v1344, 4
  %v1349 = vsel %vm323, %v1345, %v1346
  %v1350 = vsel %vm647, %v1338, %v1349
  %v1351 = vsel %vm323, %v1346, %v1347
  %v1352 = vsel %vm647, %v1340, %v1351
  %v1353 = vsel %vm323, %v1347, %v1348
  %v1354 = vsel %vm647, %v1342, %v1353
  %1358 = vst [vmem:[#allocation3 + $0x48] sm:$0x33] %v1350
  %1359 = vst [vmem:[#allocation3 + $0x50] sm:$0x33] %v1352
  %1360 = vst [vmem:[#allocation3 + $0x58] sm:$0x33] %v1354
  %v1361 = vld [vmem:[#allocation2 + $0x2] sm:$0xff]
  %v1362 = vld [vmem:[#allocation2 + $0xa] sm:$0x3f]
  %s1364 = scalar_lea.vmem [#allocation1], 1
  %1365 = vst [vmem:[%s1364] ss:$2 sm:$0xff] %v1361
  %s1367 = scalar_lea.vmem [#allocation1], 17
  %1368 = vst [vmem:[%s1367] ss:$2 sm:$0xff] %v1362
  %v1369 = vld.sshfl [vmem:[#allocation1] sm:$0xff pattern:$0x75643120]
  %v1371 = vld.sshfl [vmem:[#allocation1 + $0x8] sm:$0xff pattern:$0x75643120]
  %v1373 = vld.sshfl [vmem:[#allocation1 + $0x10] sm:$0xff pattern:$0x75643120]
  %v1375 = vld.sshfl [vmem:[#allocation1 + $0x18] sm:$0xff pattern:$0x75643120]
  %1377 = vrot.lane.b32.xlu0 %v1369, 110
  %v1378 = vpop.permute.xlu0 %1377
  %1379 = vrot.lane.b32.xlu0 %v1371, 110
  %v1380 = vpop.permute.xlu0 %1379
  %1381 = vrot.lane.b32.xlu0 %v1373, 110
  %v1382 = vpop.permute.xlu0 %1381
  %1383 = vrot.lane.b32.xlu0 %v1375, 110
  %v1384 = vpop.permute.xlu0 %1383
  %v1385 = vrot.slane %v1378, 4
  %v1386 = vrot.slane %v1380, 4
  %v1387 = vrot.slane %v1382, 4
  %v1388 = vrot.slane %v1384, 4
  %v1389 = vsel %vm323, %v1385, %v1386
  %v1390 = vsel %vm713, %v1378, %v1389
  %v1391 = vsel %vm323, %v1386, %v1387
  %v1392 = vsel %vm713, %v1380, %v1391
  %v1393 = vsel %vm323, %v1387, %v1388
  %v1394 = vsel %vm713, %v1382, %v1393
  %1398 = vst [vmem:[#allocation3 + $0x48] sm:$0xcc] %v1390
  %1399 = vst [vmem:[#allocation3 + $0x50] sm:$0xcc] %v1392
  %1400 = vst [vmem:[#allocation3 + $0x58] sm:$0xcc] %v1394
  %v1401 = vld [vmem:[#allocation2 + $0x2] sm:$0xff]
  %v1402 = vld [vmem:[#allocation2 + $0xa] sm:$0x3f]
  %1404 = vst [vmem:[#allocation1] ss:$2 sm:$0xff] %v1401
  %s1406 = scalar_lea.vmem [#allocation1], 16
  %1407 = vst [vmem:[%s1406] ss:$2 sm:$0xff] %v1402
  %v1408 = vld.sshfl [vmem:[#allocation1] sm:$0xff pattern:$0x75643120]
  %v1410 = vld.sshfl [vmem:[#allocation1 + $0x8] sm:$0xff pattern:$0x75643120]
  %v1412 = vld.sshfl [vmem:[#allocation1 + $0x10] sm:$0xff pattern:$0x75643120]
  %v1414 = vld.sshfl [vmem:[#allocation1 + $0x18] sm:$0xff pattern:$0x75643120]
  %1416 = vrot.lane.b32.xlu0 %v1408, 109
  %v1417 = vpop.permute.xlu0 %1416
  %1418 = vrot.lane.b32.xlu0 %v1410, 109
  %v1419 = vpop.permute.xlu0 %1418
  %1420 = vrot.lane.b32.xlu0 %v1412, 109
  %v1421 = vpop.permute.xlu0 %1420
  %1422 = vrot.lane.b32.xlu0 %v1414, 109
  %v1423 = vpop.permute.xlu0 %1422
  %v1424 = vrot.slane %v1417, 4
  %v1425 = vrot.slane %v1419, 4
  %v1426 = vrot.slane %v1421, 4
  %v1427 = vrot.slane %v1423, 4
  %v1428 = vsel %vm323, %v1424, %v1425
  %v1429 = vsel %vm775, %v1417, %v1428
  %v1430 = vsel %vm323, %v1425, %v1426
  %v1431 = vsel %vm775, %v1419, %v1430
  %v1432 = vsel %vm323, %v1426, %v1427
  %v1433 = vsel %vm775, %v1421, %v1432
  %1437 = vst [vmem:[#allocation3 + $0x60] sm:$0x33] %v1429
  %1438 = vst [vmem:[#allocation3 + $0x68] sm:$0x33] %v1431
  %1439 = vst [vmem:[#allocation3 + $0x70] sm:$0x33] %v1433
  %v1440 = vld [vmem:[#allocation3] sm:$0xff]
  %v1441 = vld [vmem:[#allocation3 + $0x8] sm:$0xff]
  %v1442 = vld [vmem:[#allocation3 + $0x10] sm:$0xff]
  %v1443 = vld [vmem:[#allocation3 + $0x18] sm:$0xff]
  %v1444 = vld [vmem:[#allocation3 + $0x20] sm:$0xff]
  %v1445 = vld [vmem:[#allocation3 + $0x28] sm:$0xff]
  %v1446 = vld [vmem:[#allocation3 + $0x30] sm:$0xff]
  %v1447 = vld [vmem:[#allocation3 + $0x38] sm:$0xff]
  %v1448 = vld [vmem:[#allocation3 + $0x40] sm:$0xff]
  %v1449 = vld [vmem:[#allocation3 + $0x48] sm:$0xff]
  %v1450 = vld [vmem:[#allocation3 + $0x50] sm:$0xff]
  %v1451 = vld [vmem:[#allocation3 + $0x58] sm:$0xff]
  %v1452 = vld [vmem:[#allocation3 + $0x60] sm:$0x33]
  %v1453 = vld [vmem:[#allocation3 + $0x68] sm:$0x33]
  %v1454 = vld [vmem:[#allocation3 + $0x70] sm:$0x33]
  %v1456 = vrot.slane %v135, 2
  %v1472 = vunpack.c.l.b16 %v1440
  %v1473 = vunpack.c.h.b16 %v1440
  %v1474 = vunpack.c.l.b16 %v1441
  %v1475 = vunpack.c.h.b16 %v1441
  %v1476 = vunpack.c.l.b16 %v1442
  %v1477 = vunpack.c.h.b16 %v1442
  %v1478 = vunpack.c.l.b16 %v1443
  %v1479 = vunpack.c.h.b16 %v1443
  %v1480 = vunpack.c.l.b16 %v1444
  %v1481 = vunpack.c.h.b16 %v1444
  %v1482 = vunpack.c.l.b16 %v1445
  %v1483 = vunpack.c.h.b16 %v1445
  %v1484 = vunpack.c.l.b16 %v1446
  %v1485 = vunpack.c.h.b16 %v1446
  %v1486 = vunpack.c.l.b16 %v1447
  %v1487 = vunpack.c.h.b16 %v1447
  %v1488 = vunpack.c.l.b16 %v1448
  %v1489 = vunpack.c.h.b16 %v1448
  %v1490 = vunpack.c.l.b16 %v1449
  %v1491 = vunpack.c.h.b16 %v1449
  %v1492 = vunpack.c.l.b16 %v1450
  %v1493 = vunpack.c.h.b16 %v1450
  %v1494 = vunpack.c.l.b16 %v1451
  %v1495 = vunpack.c.h.b16 %v1451
  %v1496 = vunpack.c.l.b16 %v1452
  %v1497 = vunpack.c.h.b16 %v1452
  %v1498 = vunpack.c.l.b16 %v1453
  %v1499 = vunpack.c.h.b16 %v1453
  %v1500 = vunpack.c.l.b16 %v1454
  %v1501 = vunpack.c.h.b16 %v1454
  %v1502 = vpack.c.b16 %v1478, %v1472
  %v1503 = vpack.c.b16 %v1479, %v1473
  %v1504 = vpack.c.b16 %v1480, %v1474
  %v1505 = vpack.c.b16 %v1481, %v1475
  %v1506 = vpack.c.b16 %v1482, %v1476
  %v1507 = vpack.c.b16 %v1483, %v1477
  %v1508 = vpack.c.b16 %v1490, %v1484
  %v1509 = vpack.c.b16 %v1491, %v1485
  %v1510 = vpack.c.b16 %v1492, %v1486
  %v1511 = vpack.c.b16 %v1493, %v1487
  %v1512 = vpack.c.b16 %v1494, %v1488
  %v1513 = vpack.c.b16 %v1495, %v1489
  %v1514 = vpack.c.b16 %v1496, %v1496
  %v1515 = vpack.c.b16 %v1497, %v1497
  %v1516 = vpack.c.b16 %v1498, %v1498
  %v1517 = vpack.c.b16 %v1499, %v1499
  %v1518 = vpack.c.b16 %v1500, %v1500
  %v1519 = vpack.c.b16 %v1501, %v1501
  %1532 = vst [vmem:[#allocation1] ss:$2 sm:$0xff] %v245
  %s1533 = scalar_lea.vmem [#allocation1], 16
  %1534 = vst [vmem:[%s1533] ss:$2 sm:$0xff] %v246
  %s1535 = scalar_lea.vmem [#allocation1], 32
  %1536 = vst [vmem:[%s1535] ss:$2 sm:$0xff] %v247
  %v1537 = vld.sshfl [vmem:[#allocation1] sm:$0xff pattern:$0x75316420]
  %v1538 = vld.sshfl [vmem:[#allocation1 + $0x8] sm:$0xff pattern:$0x75316420]
  %v1539 = vld.sshfl [vmem:[#allocation1 + $0x10] sm:$0xff pattern:$0x75316420]
  %v1540 = vld.sshfl [vmem:[#allocation1 + $0x18] sm:$0xff pattern:$0x75316420]
  %v1541 = vld.sshfl [vmem:[#allocation1 + $0x20] sm:$0xff pattern:$0x75316420]
  %v1542 = vld.sshfl [vmem:[#allocation1 + $0x28] sm:$0xff pattern:$0x75316420]
  %v1550 = vsel %vm877, %v1456, 0
  %v1553 = vsel %vm881, %v1514, 0
  %v1556 = vsel %vm881, %v1515, 0
  %v1559 = vsel %vm881, %v1516, 0
  %v1562 = vsel %vm881, %v1517, 0
  %v1565 = vsel %vm881, %v1518, 0
  %v1568 = vsel %vm881, %v1519, 0
  %1570 = vmatpush.bf16.msra.mxu0 0
  %1571 = vmatpush.bf16.msra.mxu0 0
  %1572 = vmatpush.bf16.msra.mxu0 0
  %1573 = vmatpush.bf16.msra.mxu0 0
  %1574 = vmatpush.bf16.msra.mxu0 0
  %1575 = vmatpush.bf16.msra.mxu0 %v1553
  %1576 = vmatpush.bf16.msra.mxu0 %v1508
  %1577 = vmatpush.bf16.msra.mxu0 %v1502
  %1578 = vmatmul.bf16.gmra.mxu0 %v1550
  %v1579 = vpop.f32.mrf.mxu0
  %v1580 = vadd.f32 %v1537, %v1579
  %v1581 = vpop.f32.mrf.mxu0
  %1582 = vdwg.mxu0
  %1583 = vmatpush.bf16.msra.mxu0 0
  %1584 = vmatpush.bf16.msra.mxu0 0
  %1585 = vmatpush.bf16.msra.mxu0 0
  %1586 = vmatpush.bf16.msra.mxu0 0
  %1587 = vmatpush.bf16.msra.mxu0 0
  %1588 = vmatpush.bf16.msra.mxu0 %v1556
  %1589 = vmatpush.bf16.msra.mxu0 %v1509
  %1590 = vmatpush.bf16.msra.mxu0 %v1503
  %1591 = vmatmul.bf16.gmra.mxu0 %v1550
  %v1592 = vpop.f32.mrf.mxu0
  %v1593 = vadd.f32 %v1538, %v1592
  %v1594 = vpop.f32.mrf.mxu0
  %1595 = vdwg.mxu0
  %1596 = vmatpush.bf16.msra.mxu0 0
  %1597 = vmatpush.bf16.msra.mxu0 0
  %1598 = vmatpush.bf16.msra.mxu0 0
  %1599 = vmatpush.bf16.msra.mxu0 0
  %1600 = vmatpush.bf16.msra.mxu0 0
  %1601 = vmatpush.bf16.msra.mxu0 %v1559
  %1602 = vmatpush.bf16.msra.mxu0 %v1510
  %1603 = vmatpush.bf16.msra.mxu0 %v1504
  %1604 = vmatmul.bf16.gmra.mxu0 %v1550
  %v1605 = vpop.f32.mrf.mxu0
  %v1606 = vadd.f32 %v1539, %v1605
  %v1607 = vpop.f32.mrf.mxu0
  %1608 = vdwg.mxu0
  %1609 = vmatpush.bf16.msra.mxu0 0
  %1610 = vmatpush.bf16.msra.mxu0 0
  %1611 = vmatpush.bf16.msra.mxu0 0
  %1612 = vmatpush.bf16.msra.mxu0 0
  %1613 = vmatpush.bf16.msra.mxu0 0
  %1614 = vmatpush.bf16.msra.mxu0 %v1562
  %1615 = vmatpush.bf16.msra.mxu0 %v1511
  %1616 = vmatpush.bf16.msra.mxu0 %v1505
  %1617 = vmatmul.bf16.gmra.mxu0 %v1550
  %v1618 = vpop.f32.mrf.mxu0
  %v1619 = vadd.f32 %v1540, %v1618
  %v1620 = vpop.f32.mrf.mxu0
  %1621 = vdwg.mxu0
  %1622 = vmatpush.bf16.msra.mxu0 0
  %1623 = vmatpush.bf16.msra.mxu0 0
  %1624 = vmatpush.bf16.msra.mxu0 0
  %1625 = vmatpush.bf16.msra.mxu0 0
  %1626 = vmatpush.bf16.msra.mxu0 0
  %1627 = vmatpush.bf16.msra.mxu0 %v1565
  %1628 = vmatpush.bf16.msra.mxu0 %v1512
  %1629 = vmatpush.bf16.msra.mxu0 %v1506
  %1630 = vmatmul.bf16.gmra.mxu0 %v1550
  %v1631 = vpop.f32.mrf.mxu0
  %v1632 = vadd.f32 %v1541, %v1631
  %v1633 = vpop.f32.mrf.mxu0
  %1634 = vdwg.mxu0
  %1635 = vmatpush.bf16.msra.mxu0 0
  %1636 = vmatpush.bf16.msra.mxu0 0
  %1637 = vmatpush.bf16.msra.mxu0 0
  %1638 = vmatpush.bf16.msra.mxu0 0
  %1639 = vmatpush.bf16.msra.mxu0 0
  %1640 = vmatpush.bf16.msra.mxu0 %v1568
  %1641 = vmatpush.bf16.msra.mxu0 %v1513
  %1642 = vmatpush.bf16.msra.mxu0 %v1507
  %1643 = vmatmul.bf16.gmra.mxu0 %v1550
  %v1644 = vpop.f32.mrf.mxu0
  %v1645 = vadd.f32 %v1542, %v1644
  %v1646 = vpop.f32.mrf.mxu0
  %1647 = vdwg.mxu0
  %v1654 = vrot.slane %v1593, 4
  %v1655 = vrot.slane %v1619, 4
  %v1656 = vrot.slane %v1645, 4
  %v1657 = vsel %vm984, %v1580, %v1654
  %v1658 = vsel %vm984, %v1606, %v1655
  %v1659 = vsel %vm984, %v1632, %v1656
  %1663 = vst [vmem:[%s5] sm:$0xff] %v1657
  %1664 = vst [vmem:[%s5 + $0x8] sm:$0xff] %v1658
  %1665 = vst [vmem:[%s5 + $0x10] sm:$0xff] %v1659
  // Predicated region
  $region22: #{pre_residual_forward.1} parent=0 // pred_check
    _
  $region23: #{pre_residual_forward.1} parent=0 // pred_check_branch
    %1667 = sbr.rel (0) target = $region25
  $region24: #{pre_residual_forward.1} parent=0 // pred_region
    _
  $region25: #{pre_residual_forward.1} parent=0 // pred_fallthru
    _
  // Predicated region
  $region26: #{pre_residual_forward.1} parent=0 // pred_check
    _
  $region27: #{pre_residual_forward.1} parent=0 // pred_check_branch
    %1669 = sbr.rel (0) target = $region29
  $region28: #{pre_residual_forward.1} parent=0 // pred_region
    _
  $region29: #{pre_residual_forward.1} parent=0 // pred_fallthru
    _

</llo_original>
